<compile_context>
chip_gen: v5e
topology: v5e:2x2
jax: 0.10.0
libtpu: 0.0.40
codegen_flags: <defaults>
</compile_context>

<pallas_src>
import jax
import jax.numpy as jnp
import numpy as np
from jax.experimental import pallas as pl
from jax.experimental.pallas import tpu as pltpu

HIDDEN_SIZE = 100          # H (logical)
HP = 128                   # H padded to lane width
LSTM_FEATURES = 1
LSTM_LAYERS = 1
FC1_OUT = 128
FC2_OUT = 256
SEQ_LEN = 8
BLOCK_B = 8                # batch rows per grid step (sublane-aligned)


def critic_kernel(prices_ref, pa_ref,
                  wih_ref, whh_ref,
                  w1t_ref, b1_ref,
                  w2t_ref, b2_ref,
                  w3h_ref, w3s_ref,
                  out_ref):
    NB = prices_ref.shape[0]          # batch rows in this block
    T = prices_ref.shape[1]           # sequence length (static)
    G = 4 * HP                        # 512 fused gate lanes

    wih = wih_ref[...]                # (1, 4HP) f32 -- tiny, keep live in vregs
    h = jnp.zeros((NB, HP), jnp.float32)
    c = jnp.zeros((NB, HP), jnp.float32)

    # Fully unrolled static T-step recurrence.  The input contribution is a
    # per-step broadcast multiply kept in vregs (no VMEM scratch).
    for t in range(T):
        xp = prices_ref[:, t:t + 1] * wih                          # (NB, G)
        # Single fused recurrent matmul (bf16 MXU inputs, f32 accumulate).
        # NOTE: whh_ref[...] intentionally inside the loop -> streamed, not
        # held live across iterations (would be 32 bf16 vregs).
        pre = xp + jnp.dot(h.astype(jnp.bfloat16), whh_ref[...],
                           preferred_element_type=jnp.float32)
        # Gate order (i, f, o, g): one contiguous sigmoid slab, one tanh slab.
        # sigmoid(x) = 0.5*tanh(0.5*x) + 0.5  (fewer EUP pushes than exp+recip;
        # the extra mul/add co-issue on the VPU).
        sig = 0.5 * jnp.tanh(0.5 * pre[:, 0:3 * HP]) + 0.5
        i_g = sig[:, 0:HP]
        f_g = sig[:, HP:2 * HP]
        o_g = sig[:, 2 * HP:3 * HP]
        g_g = jnp.tanh(pre[:, 3 * HP:G])
        c = f_g * c + i_g * g_g
        h = o_g * jnp.tanh(c)

    def elu(x):
        # alpha = 1.0; clamp exp arg so the untaken branch can't overflow.
        return jnp.where(x > 0, x, jnp.exp(jnp.minimum(x, 0.0)) - 1.0)

    # fc1 / fc2 (padded lanes of h are zero; w1t padded K rows are zero).
    z1 = elu(jnp.dot(h.astype(jnp.bfloat16), w1t_ref[...],
                     preferred_element_type=jnp.float32) + b1_ref[...])
    z2 = elu(jnp.dot(z1.astype(jnp.bfloat16), w2t_ref[...],
                     preferred_element_type=jnp.float32) + b2_ref[...])

    # fc3 with the concat expressed as a split:
    #   [z2, prev_action] @ W3^T + b3
    #     == sum(z2 * W3[:, :256], -1) + prev_action * W3[:, 256] + b3
    val = jnp.sum(z2 * w3h_ref[...], axis=-1, keepdims=True)       # (NB, 1)
    out_ref[...] = val + pa_ref[...] * w3s_ref[:, 0:1] + w3s_ref[:, 1:2]


def init_params(key):
    ks = jax.random.split(key, 8)
    H = HIDDEN_SIZE

    def unif(k, shape, fan_in):
        bound = 1.0 / np.sqrt(fan_in)
        return jax.random.uniform(k, shape, jnp.float32, -bound, bound)

    # PyTorch nn.LSTM (bias=False): weight_ih_l0 (4H, 1), weight_hh_l0 (4H, H),
    # gate order (i, f, g, o).
    w_ih_pt = unif(ks[0], (4 * H, LSTM_FEATURES), H)
    w_hh_pt = unif(ks[1], (4 * H, H), H)

    gates_ih = [w_ih_pt[k * H:(k + 1) * H, :] for k in range(4)]   # each (H, 1)
    gates_hh = [w_hh_pt[k * H:(k + 1) * H, :] for k in range(4)]   # each (H, H)
    order = (0, 1, 3, 2)   # reorder to (i, f, o, g) for contiguous sigmoid range

    def pad_ih(g):   # (H,1) -> (1, HP) zero-padded row
        return jnp.pad(g.T, ((0, 0), (0, HP - H)))

    def pad_hh(g):   # (H,H) -> (HP, HP), transposed for h @ W, zero-padded
        return jnp.pad(g.T, ((0, HP - H), (0, HP - H)))

    w_ih_fused = jnp.concatenate([pad_ih(gates_ih[k]) for k in order], axis=1)  # (1, 4HP)
    w_hh_fused = jnp.concatenate([pad_hh(gates_hh[k]) for k in order], axis=1)  # (HP, 4HP)

    # fc1: Linear(100 -> 128), fc2: Linear(128 -> 256), fc3: Linear(257 -> 1)
    w1_pt = unif(ks[2], (FC1_OUT, H), H)
    b1 = unif(ks[3], (1, FC1_OUT), H)
    w2_pt = unif(ks[4], (FC2_OUT, FC1_OUT), FC1_OUT)
    b2 = unif(ks[5], (1, FC2_OUT), FC1_OUT)
    w3_pt = unif(ks[6], (1, FC2_OUT + 1), FC2_OUT + 1)
    b3 = unif(ks[7], (1, 1), FC2_OUT + 1)

    w1t_pad = jnp.pad(w1_pt.T, ((0, HP - H), (0, 0)))   # (HP, 128), padded rows = 0

    # Pack the two leftover scalars [w3_prev_action, b3] into one lane-aligned
    # (1, HP) VMEM operand (replaces the three former (1,1) SMEM operands).
    w3s = jnp.zeros((1, HP), jnp.float32)
    w3s = w3s.at[0, 0].set(w3_pt[0, FC2_OUT]).at[0, 1].set(b3[0, 0])

    kernel_params = dict(
        wih=w_ih_fused,                                  # (1, 4HP)  f32
        whh=w_hh_fused.astype(jnp.bfloat16),             # (HP, 4HP) bf16 (MXU in)
        w1t=w1t_pad.astype(jnp.bfloat16),                # (HP, 128) bf16
        b1=b1,                                           # (1, 128)  f32
        w2t=w2_pt.T.astype(jnp.bfloat16),                # (128, 256) bf16
        b2=b2,                                           # (1, 256)  f32
        w3h=w3_pt[:, :FC2_OUT],                          # (1, 256)  f32
        w3s=w3s,                                         # (1, 128)  f32 packed
    )
    ref_params = dict(w_ih=w_ih_pt, w_hh=w_hh_pt,
                      w1=w1_pt, b1=b1, w2=w2_pt, b2=b2, w3=w3_pt, b3=b3)
    return kernel_params, ref_params


def critic_forward(prices, prev_action, kp, *, block_b=BLOCK_B):
    """prices: (B, T, 1), prev_action: (B, 1) -> value (B, 1)."""
    B, T, F = prices.shape
    assert F == LSTM_FEATURES
    b_pad = ((B + block_b - 1) // block_b) * block_b

    prices2d = prices.reshape(B, T).astype(jnp.float32)
    pa = prev_action.reshape(B, 1).astype(jnp.float32)
    if b_pad != B:
        prices2d = jnp.pad(prices2d, ((0, b_pad - B), (0, 0)))
        pa = jnp.pad(pa, ((0, b_pad - B), (0, 0)))

    grid = (b_pad // block_b,)
    out = pl.pallas_call(
        critic_kernel,
        out_shape=jax.ShapeDtypeStruct((b_pad, 1), jnp.float32),
        grid=grid,
        in_specs=[
            pl.BlockSpec((block_b, T), lambda n: (n, 0)),         # prices
            pl.BlockSpec((block_b, 1), lambda n: (n, 0)),         # prev_action
            pl.BlockSpec((1, 4 * HP), lambda n: (0, 0)),          # w_ih fused
            pl.BlockSpec((HP, 4 * HP), lambda n: (0, 0)),         # w_hh fused (bf16)
            pl.BlockSpec((HP, FC1_OUT), lambda n: (0, 0)),        # fc1^T (bf16)
            pl.BlockSpec((1, FC1_OUT), lambda n: (0, 0)),         # b1
            pl.BlockSpec((FC1_OUT, FC2_OUT), lambda n: (0, 0)),   # fc2^T (bf16)
            pl.BlockSpec((1, FC2_OUT), lambda n: (0, 0)),         # b2
            pl.BlockSpec((1, FC2_OUT), lambda n: (0, 0)),         # fc3 hidden part
            pl.BlockSpec((1, HP), lambda n: (0, 0)),              # [w3_pa, b3] packed
        ],
        out_specs=pl.BlockSpec((block_b, 1), lambda n: (n, 0)),
        compiler_params=pltpu.CompilerParams(
            dimension_semantics=("parallel",)),                   # v7x: 2 TCs split batch
    )(prices2d, pa,
      kp["wih"], kp["whh"],
      kp["w1t"], kp["b1"],
      kp["w2t"], kp["b2"],
      kp["w3h"], kp["w3s"])
    return out[:B]


def critic_reference(prices, prev_action, ref):
    """Pure-JAX f32 replica of the PyTorch forward (unpadded weights, PT gate order)."""
    B, T, _ = prices.shape
    H = HIDDEN_SIZE
    h = jnp.zeros((B, H), jnp.float32)
    c = jnp.zeros((B, H), jnp.float32)
    for t in range(T):
        x_t = prices[:, t, :]                                     # (B, 1)
        gates = x_t @ ref["w_ih"].T + h @ ref["w_hh"].T           # (B, 4H)
        i_g = jax.nn.sigmoid(gates[:, 0:H])
        f_g = jax.nn.sigmoid(gates[:, H:2 * H])
        g_g = jnp.tanh(gates[:, 2 * H:3 * H])
        o_g = jax.nn.sigmoid(gates[:, 3 * H:4 * H])
        c = f_g * c + i_g * g_g
        h = o_g * jnp.tanh(c)
    z1 = jax.nn.elu(h @ ref["w1"].T + ref["b1"])
    z2 = jax.nn.elu(z1 @ ref["w2"].T + ref["b2"])
    cat = jnp.concatenate([z2, prev_action], axis=-1)
    return cat @ ref["w3"].T + ref["b3"]


if __name__ == "__main__":
    key = jax.random.PRNGKey(0)
    k_params, k_p1, k_a1, k_pb, k_ab = jax.random.split(key, 5)

    kernel_params, ref_params = init_params(k_params)

    # Tolerance is relaxed vs. the all-f32 version because the matmul weights
    # (and their activation inputs) are bf16 on the MXU; accumulation is f32.
    ATOL = RTOL = 1e-2

    # Case 1: the module's exact shape -- batch = 1 (hidden_cell has batch 1).
    prices1 = jax.random.normal(k_p1, (1, SEQ_LEN, 1), jnp.float32)
    pa1 = jax.random.uniform(k_a1, (1, 1), jnp.float32)
    v1 = jax.block_until_ready(critic_forward(prices1, pa1, kernel_params))
    r1 = critic_reference(prices1, pa1, ref_params)
    np.testing.assert_allclose(np.asarray(v1), np.asarray(r1), atol=ATOL, rtol=RTOL)

    # Case 2: batched throughput path (grid over batch blocks; "parallel" axis).
    B = 16
    pricesb = jax.random.normal(k_pb, (B, SEQ_LEN, 1), jnp.float32)
    pab = jax.random.uniform(k_ab, (B, 1), jnp.float32)
    vb = jax.block_until_ready(critic_forward(pricesb, pab, kernel_params))
    rb = critic_reference(pricesb, pab, ref_params)
    np.testing.assert_allclose(np.asarray(vb), np.asarray(rb), atol=ATOL, rtol=RTOL)

    print("KERNEL_OK")
</pallas_src>

<mosaic_0001>
module attributes {stable_mosaic.version = 11 : i64} {
  func.func @critic_kernel(%arg0: i32, %arg1: memref<8x8xf32, #tpu.memory_space<vmem>>, %arg2: memref<8x1xf32, #tpu.memory_space<vmem>>, %arg3: memref<1x512xf32, #tpu.memory_space<vmem>>, %arg4: memref<128x512xbf16, #tpu.memory_space<vmem>>, %arg5: memref<128x128xbf16, #tpu.memory_space<vmem>>, %arg6: memref<1x128xf32, #tpu.memory_space<vmem>>, %arg7: memref<128x256xbf16, #tpu.memory_space<vmem>>, %arg8: memref<1x256xf32, #tpu.memory_space<vmem>>, %arg9: memref<1x256xf32, #tpu.memory_space<vmem>>, %arg10: memref<1x128xf32, #tpu.memory_space<vmem>>, %arg11: memref<8x1xf32, #tpu.memory_space<vmem>>) attributes {dimension_semantics = [#tpu.dimension_semantics<parallel>], iteration_bounds = array<i64: 1>, scalar_prefetch = 0 : i64, scratch_operands = 0 : i64, tpu.core_type = #tpu.core_type<tc>, window_params = [{transform_indices = @transform_0, window_bounds = array<i64: 8, 8>}, {transform_indices = @transform_1, window_bounds = array<i64: 8, 1>}, {pipeline_mode = #tpu.pipeline_mode<synchronous>, transform_indices = @transform_2, window_bounds = array<i64: 1, 512>}, {pipeline_mode = #tpu.pipeline_mode<synchronous>, transform_indices = @transform_3, window_bounds = array<i64: 128, 512>}, {pipeline_mode = #tpu.pipeline_mode<synchronous>, transform_indices = @transform_4, window_bounds = array<i64: 128, 128>}, {pipeline_mode = #tpu.pipeline_mode<synchronous>, transform_indices = @transform_5, window_bounds = array<i64: 1, 128>}, {pipeline_mode = #tpu.pipeline_mode<synchronous>, transform_indices = @transform_6, window_bounds = array<i64: 128, 256>}, {pipeline_mode = #tpu.pipeline_mode<synchronous>, transform_indices = @transform_7, window_bounds = array<i64: 1, 256>}, {pipeline_mode = #tpu.pipeline_mode<synchronous>, transform_indices = @transform_8, window_bounds = array<i64: 1, 256>}, {pipeline_mode = #tpu.pipeline_mode<synchronous>, transform_indices = @transform_9, window_bounds = array<i64: 1, 128>}, {transform_indices = @transform_10, window_bounds = array<i64: 8, 1>}]} {
    %c0 = arith.constant 0 : index
    %c0_0 = arith.constant 0 : index
    %0 = vector.load %arg3[%c0, %c0_0] : memref<1x512xf32, #tpu.memory_space<vmem>>, vector<1x512xf32>
    %cst = arith.constant 0.000000e+00 : f32
    %1 = vector.broadcast %cst : f32 to vector<8x128xf32>
    %cst_1 = arith.constant 0.000000e+00 : f32
    %2 = vector.broadcast %cst_1 : f32 to vector<8x128xf32>
    %c0_2 = arith.constant 0 : index
    %c0_3 = arith.constant 0 : index
    %3 = vector.load %arg1[%c0_2, %c0_3] : memref<8x8xf32, #tpu.memory_space<vmem>>, vector<8x1xf32>
    %4 = vector.broadcast %3 : vector<8x1xf32> to vector<8x512xf32>
    %5 = vector.broadcast %0 : vector<1x512xf32> to vector<8x512xf32>
    %6 = arith.mulf %4, %5 : vector<8x512xf32>
    %7 = arith.truncf %1 : vector<8x128xf32> to vector<8x128xbf16>
    %c0_4 = arith.constant 0 : index
    %c0_5 = arith.constant 0 : index
    %8 = vector.load %arg4[%c0_4, %c0_5] : memref<128x512xbf16, #tpu.memory_space<vmem>>, vector<128x512xbf16>
    %cst_6 = arith.constant dense<0.000000e+00> : vector<8x512xf32>
    %9 = tpu.matmul %7, %8, %cst_6 {dimension_numbers = #tpu.dot_dimension_numbers<[1], [0], [0], [1], [0, 0, 1, 1], [], []>} : vector<8x128xbf16>, vector<128x512xbf16>, vector<8x512xf32> -> vector<8x512xf32>
    %10 = arith.addf %6, %9 : vector<8x512xf32>
    %11 = vector.extract_strided_slice %10 {offsets = [0, 0], sizes = [8, 384], strides = [1, 1]} : vector<8x512xf32> to vector<8x384xf32>
    %cst_7 = arith.constant 5.000000e-01 : f32
    %12 = vector.broadcast %cst_7 : f32 to vector<8x384xf32>
    %13 = arith.mulf %12, %11 : vector<8x384xf32>
    %14 = math.tanh %13 : vector<8x384xf32>
    %cst_8 = arith.constant 5.000000e-01 : f32
    %15 = vector.broadcast %cst_8 : f32 to vector<8x384xf32>
    %16 = arith.mulf %15, %14 : vector<8x384xf32>
    %cst_9 = arith.constant 5.000000e-01 : f32
    %17 = vector.broadcast %cst_9 : f32 to vector<8x384xf32>
    %18 = arith.addf %16, %17 : vector<8x384xf32>
    %19 = vector.extract_strided_slice %18 {offsets = [0, 0], sizes = [8, 128], strides = [1, 1]} : vector<8x384xf32> to vector<8x128xf32>
    %20 = vector.extract_strided_slice %18 {offsets = [0, 128], sizes = [8, 128], strides = [1, 1]} : vector<8x384xf32> to vector<8x128xf32>
    %21 = vector.extract_strided_slice %18 {offsets = [0, 256], sizes = [8, 128], strides = [1, 1]} : vector<8x384xf32> to vector<8x128xf32>
    %22 = vector.extract_strided_slice %10 {offsets = [0, 384], sizes = [8, 128], strides = [1, 1]} : vector<8x512xf32> to vector<8x128xf32>
    %23 = math.tanh %22 : vector<8x128xf32>
    %24 = arith.mulf %20, %2 : vector<8x128xf32>
    %25 = arith.mulf %19, %23 : vector<8x128xf32>
    %26 = arith.addf %24, %25 : vector<8x128xf32>
    %27 = math.tanh %26 : vector<8x128xf32>
    %28 = arith.mulf %21, %27 : vector<8x128xf32>
    %c0_10 = arith.constant 0 : index
    %c1 = arith.constant 1 : index
    %29 = vector.load %arg1[%c0_10, %c1] : memref<8x8xf32, #tpu.memory_space<vmem>>, vector<8x1xf32>
    %30 = vector.broadcast %29 : vector<8x1xf32> to vector<8x512xf32>
    %31 = vector.broadcast %0 : vector<1x512xf32> to vector<8x512xf32>
    %32 = arith.mulf %30, %31 : vector<8x512xf32>
    %33 = arith.truncf %28 : vector<8x128xf32> to vector<8x128xbf16>
    %c0_11 = arith.constant 0 : index
    %c0_12 = arith.constant 0 : index
    %34 = vector.load %arg4[%c0_11, %c0_12] : memref<128x512xbf16, #tpu.memory_space<vmem>>, vector<128x512xbf16>
    %cst_13 = arith.constant dense<0.000000e+00> : vector<8x512xf32>
    %35 = tpu.matmul %33, %34, %cst_13 {dimension_numbers = #tpu.dot_dimension_numbers<[1], [0], [0], [1], [0, 0, 1, 1], [], []>} : vector<8x128xbf16>, vector<128x512xbf16>, vector<8x512xf32> -> vector<8x512xf32>
    %36 = arith.addf %32, %35 : vector<8x512xf32>
    %37 = vector.extract_strided_slice %36 {offsets = [0, 0], sizes = [8, 384], strides = [1, 1]} : vector<8x512xf32> to vector<8x384xf32>
    %cst_14 = arith.constant 5.000000e-01 : f32
    %38 = vector.broadcast %cst_14 : f32 to vector<8x384xf32>
    %39 = arith.mulf %38, %37 : vector<8x384xf32>
    %40 = math.tanh %39 : vector<8x384xf32>
    %cst_15 = arith.constant 5.000000e-01 : f32
    %41 = vector.broadcast %cst_15 : f32 to vector<8x384xf32>
    %42 = arith.mulf %41, %40 : vector<8x384xf32>
    %cst_16 = arith.constant 5.000000e-01 : f32
    %43 = vector.broadcast %cst_16 : f32 to vector<8x384xf32>
    %44 = arith.addf %42, %43 : vector<8x384xf32>
    %45 = vector.extract_strided_slice %44 {offsets = [0, 0], sizes = [8, 128], strides = [1, 1]} : vector<8x384xf32> to vector<8x128xf32>
    %46 = vector.extract_strided_slice %44 {offsets = [0, 128], sizes = [8, 128], strides = [1, 1]} : vector<8x384xf32> to vector<8x128xf32>
    %47 = vector.extract_strided_slice %44 {offsets = [0, 256], sizes = [8, 128], strides = [1, 1]} : vector<8x384xf32> to vector<8x128xf32>
    %48 = vector.extract_strided_slice %36 {offsets = [0, 384], sizes = [8, 128], strides = [1, 1]} : vector<8x512xf32> to vector<8x128xf32>
    %49 = math.tanh %48 : vector<8x128xf32>
    %50 = arith.mulf %46, %26 : vector<8x128xf32>
    %51 = arith.mulf %45, %49 : vector<8x128xf32>
    %52 = arith.addf %50, %51 : vector<8x128xf32>
    %53 = math.tanh %52 : vector<8x128xf32>
    %54 = arith.mulf %47, %53 : vector<8x128xf32>
    %c0_17 = arith.constant 0 : index
    %c2 = arith.constant 2 : index
    %55 = vector.load %arg1[%c0_17, %c2] : memref<8x8xf32, #tpu.memory_space<vmem>>, vector<8x1xf32>
    %56 = vector.broadcast %55 : vector<8x1xf32> to vector<8x512xf32>
    %57 = vector.broadcast %0 : vector<1x512xf32> to vector<8x512xf32>
    %58 = arith.mulf %56, %57 : vector<8x512xf32>
    %59 = arith.truncf %54 : vector<8x128xf32> to vector<8x128xbf16>
    %c0_18 = arith.constant 0 : index
    %c0_19 = arith.constant 0 : index
    %60 = vector.load %arg4[%c0_18, %c0_19] : memref<128x512xbf16, #tpu.memory_space<vmem>>, vector<128x512xbf16>
    %cst_20 = arith.constant dense<0.000000e+00> : vector<8x512xf32>
    %61 = tpu.matmul %59, %60, %cst_20 {dimension_numbers = #tpu.dot_dimension_numbers<[1], [0], [0], [1], [0, 0, 1, 1], [], []>} : vector<8x128xbf16>, vector<128x512xbf16>, vector<8x512xf32> -> vector<8x512xf32>
    %62 = arith.addf %58, %61 : vector<8x512xf32>
    %63 = vector.extract_strided_slice %62 {offsets = [0, 0], sizes = [8, 384], strides = [1, 1]} : vector<8x512xf32> to vector<8x384xf32>
    %cst_21 = arith.constant 5.000000e-01 : f32
    %64 = vector.broadcast %cst_21 : f32 to vector<8x384xf32>
    %65 = arith.mulf %64, %63 : vector<8x384xf32>
    %66 = math.tanh %65 : vector<8x384xf32>
    %cst_22 = arith.constant 5.000000e-01 : f32
    %67 = vector.broadcast %cst_22 : f32 to vector<8x384xf32>
    %68 = arith.mulf %67, %66 : vector<8x384xf32>
    %cst_23 = arith.constant 5.000000e-01 : f32
    %69 = vector.broadcast %cst_23 : f32 to vector<8x384xf32>
    %70 = arith.addf %68, %69 : vector<8x384xf32>
    %71 = vector.extract_strided_slice %70 {offsets = [0, 0], sizes = [8, 128], strides = [1, 1]} : vector<8x384xf32> to vector<8x128xf32>
    %72 = vector.extract_strided_slice %70 {offsets = [0, 128], sizes = [8, 128], strides = [1, 1]} : vector<8x384xf32> to vector<8x128xf32>
    %73 = vector.extract_strided_slice %70 {offsets = [0, 256], sizes = [8, 128], strides = [1, 1]} : vector<8x384xf32> to vector<8x128xf32>
    %74 = vector.extract_strided_slice %62 {offsets = [0, 384], sizes = [8, 128], strides = [1, 1]} : vector<8x512xf32> to vector<8x128xf32>
    %75 = math.tanh %74 : vector<8x128xf32>
    %76 = arith.mulf %72, %52 : vector<8x128xf32>
    %77 = arith.mulf %71, %75 : vector<8x128xf32>
    %78 = arith.addf %76, %77 : vector<8x128xf32>
    %79 = math.tanh %78 : vector<8x128xf32>
    %80 = arith.mulf %73, %79 : vector<8x128xf32>
    %c0_24 = arith.constant 0 : index
    %c3 = arith.constant 3 : index
    %81 = vector.load %arg1[%c0_24, %c3] : memref<8x8xf32, #tpu.memory_space<vmem>>, vector<8x1xf32>
    %82 = vector.broadcast %81 : vector<8x1xf32> to vector<8x512xf32>
    %83 = vector.broadcast %0 : vector<1x512xf32> to vector<8x512xf32>
    %84 = arith.mulf %82, %83 : vector<8x512xf32>
    %85 = arith.truncf %80 : vector<8x128xf32> to vector<8x128xbf16>
    %c0_25 = arith.constant 0 : index
    %c0_26 = arith.constant 0 : index
    %86 = vector.load %arg4[%c0_25, %c0_26] : memref<128x512xbf16, #tpu.memory_space<vmem>>, vector<128x512xbf16>
    %cst_27 = arith.constant dense<0.000000e+00> : vector<8x512xf32>
    %87 = tpu.matmul %85, %86, %cst_27 {dimension_numbers = #tpu.dot_dimension_numbers<[1], [0], [0], [1], [0, 0, 1, 1], [], []>} : vector<8x128xbf16>, vector<128x512xbf16>, vector<8x512xf32> -> vector<8x512xf32>
    %88 = arith.addf %84, %87 : vector<8x512xf32>
    %89 = vector.extract_strided_slice %88 {offsets = [0, 0], sizes = [8, 384], strides = [1, 1]} : vector<8x512xf32> to vector<8x384xf32>
    %cst_28 = arith.constant 5.000000e-01 : f32
    %90 = vector.broadcast %cst_28 : f32 to vector<8x384xf32>
    %91 = arith.mulf %90, %89 : vector<8x384xf32>
    %92 = math.tanh %91 : vector<8x384xf32>
    %cst_29 = arith.constant 5.000000e-01 : f32
    %93 = vector.broadcast %cst_29 : f32 to vector<8x384xf32>
    %94 = arith.mulf %93, %92 : vector<8x384xf32>
    %cst_30 = arith.constant 5.000000e-01 : f32
    %95 = vector.broadcast %cst_30 : f32 to vector<8x384xf32>
    %96 = arith.addf %94, %95 : vector<8x384xf32>
    %97 = vector.extract_strided_slice %96 {offsets = [0, 0], sizes = [8, 128], strides = [1, 1]} : vector<8x384xf32> to vector<8x128xf32>
    %98 = vector.extract_strided_slice %96 {offsets = [0, 128], sizes = [8, 128], strides = [1, 1]} : vector<8x384xf32> to vector<8x128xf32>
    %99 = vector.extract_strided_slice %96 {offsets = [0, 256], sizes = [8, 128], strides = [1, 1]} : vector<8x384xf32> to vector<8x128xf32>
    %100 = vector.extract_strided_slice %88 {offsets = [0, 384], sizes = [8, 128], strides = [1, 1]} : vector<8x512xf32> to vector<8x128xf32>
    %101 = math.tanh %100 : vector<8x128xf32>
    %102 = arith.mulf %98, %78 : vector<8x128xf32>
    %103 = arith.mulf %97, %101 : vector<8x128xf32>
    %104 = arith.addf %102, %103 : vector<8x128xf32>
    %105 = math.tanh %104 : vector<8x128xf32>
    %106 = arith.mulf %99, %105 : vector<8x128xf32>
    %c0_31 = arith.constant 0 : index
    %c4 = arith.constant 4 : index
    %107 = vector.load %arg1[%c0_31, %c4] : memref<8x8xf32, #tpu.memory_space<vmem>>, vector<8x1xf32>
    %108 = vector.broadcast %107 : vector<8x1xf32> to vector<8x512xf32>
    %109 = vector.broadcast %0 : vector<1x512xf32> to vector<8x512xf32>
    %110 = arith.mulf %108, %109 : vector<8x512xf32>
    %111 = arith.truncf %106 : vector<8x128xf32> to vector<8x128xbf16>
    %c0_32 = arith.constant 0 : index
    %c0_33 = arith.constant 0 : index
    %112 = vector.load %arg4[%c0_32, %c0_33] : memref<128x512xbf16, #tpu.memory_space<vmem>>, vector<128x512xbf16>
    %cst_34 = arith.constant dense<0.000000e+00> : vector<8x512xf32>
    %113 = tpu.matmul %111, %112, %cst_34 {dimension_numbers = #tpu.dot_dimension_numbers<[1], [0], [0], [1], [0, 0, 1, 1], [], []>} : vector<8x128xbf16>, vector<128x512xbf16>, vector<8x512xf32> -> vector<8x512xf32>
    %114 = arith.addf %110, %113 : vector<8x512xf32>
    %115 = vector.extract_strided_slice %114 {offsets = [0, 0], sizes = [8, 384], strides = [1, 1]} : vector<8x512xf32> to vector<8x384xf32>
    %cst_35 = arith.constant 5.000000e-01 : f32
    %116 = vector.broadcast %cst_35 : f32 to vector<8x384xf32>
    %117 = arith.mulf %116, %115 : vector<8x384xf32>
    %118 = math.tanh %117 : vector<8x384xf32>
    %cst_36 = arith.constant 5.000000e-01 : f32
    %119 = vector.broadcast %cst_36 : f32 to vector<8x384xf32>
    %120 = arith.mulf %119, %118 : vector<8x384xf32>
    %cst_37 = arith.constant 5.000000e-01 : f32
    %121 = vector.broadcast %cst_37 : f32 to vector<8x384xf32>
    %122 = arith.addf %120, %121 : vector<8x384xf32>
    %123 = vector.extract_strided_slice %122 {offsets = [0, 0], sizes = [8, 128], strides = [1, 1]} : vector<8x384xf32> to vector<8x128xf32>
    %124 = vector.extract_strided_slice %122 {offsets = [0, 128], sizes = [8, 128], strides = [1, 1]} : vector<8x384xf32> to vector<8x128xf32>
    %125 = vector.extract_strided_slice %122 {offsets = [0, 256], sizes = [8, 128], strides = [1, 1]} : vector<8x384xf32> to vector<8x128xf32>
    %126 = vector.extract_strided_slice %114 {offsets = [0, 384], sizes = [8, 128], strides = [1, 1]} : vector<8x512xf32> to vector<8x128xf32>
    %127 = math.tanh %126 : vector<8x128xf32>
    %128 = arith.mulf %124, %104 : vector<8x128xf32>
    %129 = arith.mulf %123, %127 : vector<8x128xf32>
    %130 = arith.addf %128, %129 : vector<8x128xf32>
    %131 = math.tanh %130 : vector<8x128xf32>
    %132 = arith.mulf %125, %131 : vector<8x128xf32>
    %c0_38 = arith.constant 0 : index
    %c5 = arith.constant 5 : index
    %133 = vector.load %arg1[%c0_38, %c5] : memref<8x8xf32, #tpu.memory_space<vmem>>, vector<8x1xf32>
    %134 = vector.broadcast %133 : vector<8x1xf32> to vector<8x512xf32>
    %135 = vector.broadcast %0 : vector<1x512xf32> to vector<8x512xf32>
    %136 = arith.mulf %134, %135 : vector<8x512xf32>
    %137 = arith.truncf %132 : vector<8x128xf32> to vector<8x128xbf16>
    %c0_39 = arith.constant 0 : index
    %c0_40 = arith.constant 0 : index
    %138 = vector.load %arg4[%c0_39, %c0_40] : memref<128x512xbf16, #tpu.memory_space<vmem>>, vector<128x512xbf16>
    %cst_41 = arith.constant dense<0.000000e+00> : vector<8x512xf32>
    %139 = tpu.matmul %137, %138, %cst_41 {dimension_numbers = #tpu.dot_dimension_numbers<[1], [0], [0], [1], [0, 0, 1, 1], [], []>} : vector<8x128xbf16>, vector<128x512xbf16>, vector<8x512xf32> -> vector<8x512xf32>
    %140 = arith.addf %136, %139 : vector<8x512xf32>
    %141 = vector.extract_strided_slice %140 {offsets = [0, 0], sizes = [8, 384], strides = [1, 1]} : vector<8x512xf32> to vector<8x384xf32>
    %cst_42 = arith.constant 5.000000e-01 : f32
    %142 = vector.broadcast %cst_42 : f32 to vector<8x384xf32>
    %143 = arith.mulf %142, %141 : vector<8x384xf32>
    %144 = math.tanh %143 : vector<8x384xf32>
    %cst_43 = arith.constant 5.000000e-01 : f32
    %145 = vector.broadcast %cst_43 : f32 to vector<8x384xf32>
    %146 = arith.mulf %145, %144 : vector<8x384xf32>
    %cst_44 = arith.constant 5.000000e-01 : f32
    %147 = vector.broadcast %cst_44 : f32 to vector<8x384xf32>
    %148 = arith.addf %146, %147 : vector<8x384xf32>
    %149 = vector.extract_strided_slice %148 {offsets = [0, 0], sizes = [8, 128], strides = [1, 1]} : vector<8x384xf32> to vector<8x128xf32>
    %150 = vector.extract_strided_slice %148 {offsets = [0, 128], sizes = [8, 128], strides = [1, 1]} : vector<8x384xf32> to vector<8x128xf32>
    %151 = vector.extract_strided_slice %148 {offsets = [0, 256], sizes = [8, 128], strides = [1, 1]} : vector<8x384xf32> to vector<8x128xf32>
    %152 = vector.extract_strided_slice %140 {offsets = [0, 384], sizes = [8, 128], strides = [1, 1]} : vector<8x512xf32> to vector<8x128xf32>
    %153 = math.tanh %152 : vector<8x128xf32>
    %154 = arith.mulf %150, %130 : vector<8x128xf32>
    %155 = arith.mulf %149, %153 : vector<8x128xf32>
    %156 = arith.addf %154, %155 : vector<8x128xf32>
    %157 = math.tanh %156 : vector<8x128xf32>
    %158 = arith.mulf %151, %157 : vector<8x128xf32>
    %c0_45 = arith.constant 0 : index
    %c6 = arith.constant 6 : index
    %159 = vector.load %arg1[%c0_45, %c6] : memref<8x8xf32, #tpu.memory_space<vmem>>, vector<8x1xf32>
    %160 = vector.broadcast %159 : vector<8x1xf32> to vector<8x512xf32>
    %161 = vector.broadcast %0 : vector<1x512xf32> to vector<8x512xf32>
    %162 = arith.mulf %160, %161 : vector<8x512xf32>
    %163 = arith.truncf %158 : vector<8x128xf32> to vector<8x128xbf16>
    %c0_46 = arith.constant 0 : index
    %c0_47 = arith.constant 0 : index
    %164 = vector.load %arg4[%c0_46, %c0_47] : memref<128x512xbf16, #tpu.memory_space<vmem>>, vector<128x512xbf16>
    %cst_48 = arith.constant dense<0.000000e+00> : vector<8x512xf32>
    %165 = tpu.matmul %163, %164, %cst_48 {dimension_numbers = #tpu.dot_dimension_numbers<[1], [0], [0], [1], [0, 0, 1, 1], [], []>} : vector<8x128xbf16>, vector<128x512xbf16>, vector<8x512xf32> -> vector<8x512xf32>
    %166 = arith.addf %162, %165 : vector<8x512xf32>
    %167 = vector.extract_strided_slice %166 {offsets = [0, 0], sizes = [8, 384], strides = [1, 1]} : vector<8x512xf32> to vector<8x384xf32>
    %cst_49 = arith.constant 5.000000e-01 : f32
    %168 = vector.broadcast %cst_49 : f32 to vector<8x384xf32>
    %169 = arith.mulf %168, %167 : vector<8x384xf32>
    %170 = math.tanh %169 : vector<8x384xf32>
    %cst_50 = arith.constant 5.000000e-01 : f32
    %171 = vector.broadcast %cst_50 : f32 to vector<8x384xf32>
    %172 = arith.mulf %171, %170 : vector<8x384xf32>
    %cst_51 = arith.constant 5.000000e-01 : f32
    %173 = vector.broadcast %cst_51 : f32 to vector<8x384xf32>
    %174 = arith.addf %172, %173 : vector<8x384xf32>
    %175 = vector.extract_strided_slice %174 {offsets = [0, 0], sizes = [8, 128], strides = [1, 1]} : vector<8x384xf32> to vector<8x128xf32>
    %176 = vector.extract_strided_slice %174 {offsets = [0, 128], sizes = [8, 128], strides = [1, 1]} : vector<8x384xf32> to vector<8x128xf32>
    %177 = vector.extract_strided_slice %174 {offsets = [0, 256], sizes = [8, 128], strides = [1, 1]} : vector<8x384xf32> to vector<8x128xf32>
    %178 = vector.extract_strided_slice %166 {offsets = [0, 384], sizes = [8, 128], strides = [1, 1]} : vector<8x512xf32> to vector<8x128xf32>
    %179 = math.tanh %178 : vector<8x128xf32>
    %180 = arith.mulf %176, %156 : vector<8x128xf32>
    %181 = arith.mulf %175, %179 : vector<8x128xf32>
    %182 = arith.addf %180, %181 : vector<8x128xf32>
    %183 = math.tanh %182 : vector<8x128xf32>
    %184 = arith.mulf %177, %183 : vector<8x128xf32>
    %c0_52 = arith.constant 0 : index
    %c7 = arith.constant 7 : index
    %185 = vector.load %arg1[%c0_52, %c7] : memref<8x8xf32, #tpu.memory_space<vmem>>, vector<8x1xf32>
    %186 = vector.broadcast %185 : vector<8x1xf32> to vector<8x512xf32>
    %187 = vector.broadcast %0 : vector<1x512xf32> to vector<8x512xf32>
    %188 = arith.mulf %186, %187 : vector<8x512xf32>
    %189 = arith.truncf %184 : vector<8x128xf32> to vector<8x128xbf16>
    %c0_53 = arith.constant 0 : index
    %c0_54 = arith.constant 0 : index
    %190 = vector.load %arg4[%c0_53, %c0_54] : memref<128x512xbf16, #tpu.memory_space<vmem>>, vector<128x512xbf16>
    %cst_55 = arith.constant dense<0.000000e+00> : vector<8x512xf32>
    %191 = tpu.matmul %189, %190, %cst_55 {dimension_numbers = #tpu.dot_dimension_numbers<[1], [0], [0], [1], [0, 0, 1, 1], [], []>} : vector<8x128xbf16>, vector<128x512xbf16>, vector<8x512xf32> -> vector<8x512xf32>
    %192 = arith.addf %188, %191 : vector<8x512xf32>
    %193 = vector.extract_strided_slice %192 {offsets = [0, 0], sizes = [8, 384], strides = [1, 1]} : vector<8x512xf32> to vector<8x384xf32>
    %cst_56 = arith.constant 5.000000e-01 : f32
    %194 = vector.broadcast %cst_56 : f32 to vector<8x384xf32>
    %195 = arith.mulf %194, %193 : vector<8x384xf32>
    %196 = math.tanh %195 : vector<8x384xf32>
    %cst_57 = arith.constant 5.000000e-01 : f32
    %197 = vector.broadcast %cst_57 : f32 to vector<8x384xf32>
    %198 = arith.mulf %197, %196 : vector<8x384xf32>
    %cst_58 = arith.constant 5.000000e-01 : f32
    %199 = vector.broadcast %cst_58 : f32 to vector<8x384xf32>
    %200 = arith.addf %198, %199 : vector<8x384xf32>
    %201 = vector.extract_strided_slice %200 {offsets = [0, 0], sizes = [8, 128], strides = [1, 1]} : vector<8x384xf32> to vector<8x128xf32>
    %202 = vector.extract_strided_slice %200 {offsets = [0, 128], sizes = [8, 128], strides = [1, 1]} : vector<8x384xf32> to vector<8x128xf32>
    %203 = vector.extract_strided_slice %200 {offsets = [0, 256], sizes = [8, 128], strides = [1, 1]} : vector<8x384xf32> to vector<8x128xf32>
    %204 = vector.extract_strided_slice %192 {offsets = [0, 384], sizes = [8, 128], strides = [1, 1]} : vector<8x512xf32> to vector<8x128xf32>
    %205 = math.tanh %204 : vector<8x128xf32>
    %206 = arith.mulf %202, %182 : vector<8x128xf32>
    %207 = arith.mulf %201, %205 : vector<8x128xf32>
    %208 = arith.addf %206, %207 : vector<8x128xf32>
    %209 = math.tanh %208 : vector<8x128xf32>
    %210 = arith.mulf %203, %209 : vector<8x128xf32>
    %211 = arith.truncf %210 : vector<8x128xf32> to vector<8x128xbf16>
    %c0_59 = arith.constant 0 : index
    %c0_60 = arith.constant 0 : index
    %212 = vector.load %arg5[%c0_59, %c0_60] : memref<128x128xbf16, #tpu.memory_space<vmem>>, vector<128x128xbf16>
    %cst_61 = arith.constant dense<0.000000e+00> : vector<8x128xf32>
    %213 = tpu.matmul %211, %212, %cst_61 {dimension_numbers = #tpu.dot_dimension_numbers<[1], [0], [0], [1], [0, 0, 1, 1], [], []>} : vector<8x128xbf16>, vector<128x128xbf16>, vector<8x128xf32> -> vector<8x128xf32>
    %c0_62 = arith.constant 0 : index
    %c0_63 = arith.constant 0 : index
    %214 = vector.load %arg6[%c0_62, %c0_63] : memref<1x128xf32, #tpu.memory_space<vmem>>, vector<1x128xf32>
    %215 = vector.broadcast %214 : vector<1x128xf32> to vector<8x128xf32>
    %216 = arith.addf %213, %215 : vector<8x128xf32>
    %cst_64 = arith.constant 0.000000e+00 : f32
    %217 = vector.broadcast %cst_64 : f32 to vector<8x128xf32>
    %218 = arith.cmpf ogt, %216, %217 : vector<8x128xf32>
    %cst_65 = arith.constant 0.000000e+00 : f32
    %219 = vector.broadcast %cst_65 : f32 to vector<8x128xf32>
    %220 = arith.minimumf %216, %219 : vector<8x128xf32>
    %221 = math.exp %220 : vector<8x128xf32>
    %cst_66 = arith.constant 1.000000e+00 : f32
    %222 = vector.broadcast %cst_66 : f32 to vector<8x128xf32>
    %223 = arith.subf %221, %222 : vector<8x128xf32>
    %224 = arith.select %218, %216, %223 : vector<8x128xi1>, vector<8x128xf32>
    %225 = arith.truncf %224 : vector<8x128xf32> to vector<8x128xbf16>
    %c0_67 = arith.constant 0 : index
    %c0_68 = arith.constant 0 : index
    %226 = vector.load %arg7[%c0_67, %c0_68] : memref<128x256xbf16, #tpu.memory_space<vmem>>, vector<128x256xbf16>
    %cst_69 = arith.constant dense<0.000000e+00> : vector<8x256xf32>
    %227 = tpu.matmul %225, %226, %cst_69 {dimension_numbers = #tpu.dot_dimension_numbers<[1], [0], [0], [1], [0, 0, 1, 1], [], []>} : vector<8x128xbf16>, vector<128x256xbf16>, vector<8x256xf32> -> vector<8x256xf32>
    %c0_70 = arith.constant 0 : index
    %c0_71 = arith.constant 0 : index
    %228 = vector.load %arg8[%c0_70, %c0_71] : memref<1x256xf32, #tpu.memory_space<vmem>>, vector<1x256xf32>
    %229 = vector.broadcast %228 : vector<1x256xf32> to vector<8x256xf32>
    %230 = arith.addf %227, %229 : vector<8x256xf32>
    %cst_72 = arith.constant 0.000000e+00 : f32
    %231 = vector.broadcast %cst_72 : f32 to vector<8x256xf32>
    %232 = arith.cmpf ogt, %230, %231 : vector<8x256xf32>
    %cst_73 = arith.constant 0.000000e+00 : f32
    %233 = vector.broadcast %cst_73 : f32 to vector<8x256xf32>
    %234 = arith.minimumf %230, %233 : vector<8x256xf32>
    %235 = math.exp %234 : vector<8x256xf32>
    %cst_74 = arith.constant 1.000000e+00 : f32
    %236 = vector.broadcast %cst_74 : f32 to vector<8x256xf32>
    %237 = arith.subf %235, %236 : vector<8x256xf32>
    %238 = arith.select %232, %230, %237 : vector<8x256xi1>, vector<8x256xf32>
    %c0_75 = arith.constant 0 : index
    %c0_76 = arith.constant 0 : index
    %239 = vector.load %arg9[%c0_75, %c0_76] : memref<1x256xf32, #tpu.memory_space<vmem>>, vector<1x256xf32>
    %240 = vector.broadcast %239 : vector<1x256xf32> to vector<8x256xf32>
    %241 = arith.mulf %238, %240 : vector<8x256xf32>
    %cst_77 = arith.constant dense<0.000000e+00> : vector<8xf32>
    %242 = vector.multi_reduction <add>, %241, %cst_77 [1] : vector<8x256xf32> to vector<8xf32>
    %243 = vector.shape_cast %242 : vector<8xf32> to vector<8x1xf32>
    %c0_78 = arith.constant 0 : index
    %c0_79 = arith.constant 0 : index
    %244 = vector.load %arg2[%c0_78, %c0_79] : memref<8x1xf32, #tpu.memory_space<vmem>>, vector<8x1xf32>
    %c0_80 = arith.constant 0 : index
    %c0_81 = arith.constant 0 : index
    %245 = vector.load %arg10[%c0_80, %c0_81] : memref<1x128xf32, #tpu.memory_space<vmem>>, vector<1x1xf32>
    %246 = vector.broadcast %245 : vector<1x1xf32> to vector<8x1xf32>
    %247 = arith.mulf %244, %246 : vector<8x1xf32>
    %248 = arith.addf %243, %247 : vector<8x1xf32>
    %c0_82 = arith.constant 0 : index
    %c1_83 = arith.constant 1 : index
    %249 = vector.load %arg10[%c0_82, %c1_83] : memref<1x128xf32, #tpu.memory_space<vmem>>, vector<1x1xf32>
    %250 = vector.broadcast %249 : vector<1x1xf32> to vector<8x1xf32>
    %251 = arith.addf %248, %250 : vector<8x1xf32>
    %c0_84 = arith.constant 0 : index
    %c0_85 = arith.constant 0 : index
    %252 = vector.load %arg11[%c0_84, %c0_85] : memref<8x1xf32, #tpu.memory_space<vmem>>, vector<8x1xf32>
    tpu.vector_store %arg11[%c0_84, %c0_85], %251 {strides = array<i32>} : memref<8x1xf32, #tpu.memory_space<vmem>>, vector<8x1xf32>,
    return
  }
  func.func @transform_0(%arg0: i32) -> (i32, i32) {
    %c0_i32 = arith.constant 0 : i32
    %c0_i32_0 = arith.constant 0 : i32
    return %arg0, %c0_i32 : i32, i32
  }
  func.func @transform_1(%arg0: i32) -> (i32, i32) {
    %c0_i32 = arith.constant 0 : i32
    %c0_i32_0 = arith.constant 0 : i32
    return %arg0, %c0_i32 : i32, i32
  }
  func.func @transform_2(%arg0: i32) -> (i32, i32) {
    %c0_i32 = arith.constant 0 : i32
    %c0_i32_0 = arith.constant 0 : i32
    %c0_i32_1 = arith.constant 0 : i32
    return %c0_i32, %c0_i32_0 : i32, i32
  }
  func.func @transform_3(%arg0: i32) -> (i32, i32) {
    %c0_i32 = arith.constant 0 : i32
    %c0_i32_0 = arith.constant 0 : i32
    %c0_i32_1 = arith.constant 0 : i32
    return %c0_i32, %c0_i32_0 : i32, i32
  }
  func.func @transform_4(%arg0: i32) -> (i32, i32) {
    %c0_i32 = arith.constant 0 : i32
    %c0_i32_0 = arith.constant 0 : i32
    %c0_i32_1 = arith.constant 0 : i32
    return %c0_i32, %c0_i32_0 : i32, i32
  }
  func.func @transform_5(%arg0: i32) -> (i32, i32) {
    %c0_i32 = arith.constant 0 : i32
    %c0_i32_0 = arith.constant 0 : i32
    %c0_i32_1 = arith.constant 0 : i32
    return %c0_i32, %c0_i32_0 : i32, i32
  }
  func.func @transform_6(%arg0: i32) -> (i32, i32) {
    %c0_i32 = arith.constant 0 : i32
    %c0_i32_0 = arith.constant 0 : i32
    %c0_i32_1 = arith.constant 0 : i32
    return %c0_i32, %c0_i32_0 : i32, i32
  }
  func.func @transform_7(%arg0: i32) -> (i32, i32) {
    %c0_i32 = arith.constant 0 : i32
    %c0_i32_0 = arith.constant 0 : i32
    %c0_i32_1 = arith.constant 0 : i32
    return %c0_i32, %c0_i32_0 : i32, i32
  }
  func.func @transform_8(%arg0: i32) -> (i32, i32) {
    %c0_i32 = arith.constant 0 : i32
    %c0_i32_0 = arith.constant 0 : i32
    %c0_i32_1 = arith.constant 0 : i32
    return %c0_i32, %c0_i32_0 : i32, i32
  }
  func.func @transform_9(%arg0: i32) -> (i32, i32) {
    %c0_i32 = arith.constant 0 : i32
    %c0_i32_0 = arith.constant 0 : i32
    %c0_i32_1 = arith.constant 0 : i32
    return %c0_i32, %c0_i32_0 : i32, i32
  }
  func.func @transform_10(%arg0: i32) -> (i32, i32) {
    %c0_i32 = arith.constant 0 : i32
    %c0_i32_0 = arith.constant 0 : i32
    return %arg0, %c0_i32 : i32, i32
  }
}

</mosaic_0001>

<llo_original>
// kernel: tpu_custom_call.1
$region0: #{tpu_custom_call.1}
  #allocation0 [shape = 'u32[]', space=smem, size = 0x4, offset = 0x4, fixed_abs, tag = 'smem constant byte address 0x4 - core index']
  #allocation1 [shape = 'u32[72,128]{1,0:T(1,128)}', space=vmem, size = 0x9000, scoped, tag = 'internal scratch']
  %s0 = inlined_call_operand.vmem [shape: f32[8,8], index: 0, kind: input, shape index: {}]
  %s1 = inlined_call_operand.vmem [shape: f32[8,1], index: 1, kind: input, shape index: {}]
  %s2 = inlined_call_operand.hbm [shape: f32[1,512], index: 2, kind: input, shape index: {}]
  %s3 = inlined_call_operand.hbm [shape: bf16[128,512], index: 3, kind: input, shape index: {}]
  %s4 = inlined_call_operand.hbm [shape: bf16[128,128], index: 4, kind: input, shape index: {}]
  %s5 = inlined_call_operand.vmem [shape: f32[1,128], index: 5, kind: input, shape index: {}]
  %s6 = inlined_call_operand.hbm [shape: bf16[128,256], index: 6, kind: input, shape index: {}]
  %s7 = inlined_call_operand.vmem [shape: f32[1,256], index: 7, kind: input, shape index: {}]
  %s8 = inlined_call_operand.vmem [shape: f32[1,256], index: 8, kind: input, shape index: {}]
  %s9 = inlined_call_operand.vmem [shape: f32[1,128], index: 9, kind: input, shape index: {}]
  %s10 = inlined_call_operand.vmem [shape: f32[8,1], index: 10, kind: output, shape index: {}]
  %s11 = sld [smem:[#allocation0]]
  $region66: #{tpu_custom_call.1} parent=0
    _
  %s13 = ssub.s32 1, %s11
  %s14 = scalar_select 0, %s13, %s11
  $region1: #{tpu_custom_call.1} parent=0
    #allocation2 [shape = 'u8[2048]{0}', space=vmem, size = 0x800, scoped, tag = 'input window, operand 2, single buffered']
    #allocation3 [shape = 's32[1]{0}', space=sflag, size = 0x4, scoped, tag = 'scoped memory for tpu_custom_call.1']
    #allocation4 [shape = 'u8[131072]{0}', space=vmem, size = 0x20000, scoped, tag = 'input window, operand 3, single buffered']
    #allocation5 [shape = 's32[1]{0}', space=sflag, size = 0x4, scoped, tag = 'scoped memory for tpu_custom_call.1']
    #allocation6 [shape = 'u8[32768]{0}', space=vmem, size = 0x8000, scoped, tag = 'input window, operand 4, single buffered']
    #allocation7 [shape = 'u8[65536]{0}', space=vmem, size = 0x10000, scoped, tag = 'input window, operand 6, single buffered']
    #allocation8 [shape = 's32[1]{0}', space=sflag, size = 0x4, scoped, tag = 'scoped memory for tpu_custom_call.1']
    %15 = vsyncpa [#allocation3], 0
    %16 = vsyncpa [#allocation5], 0
    %17 = vsyncpa [#allocation8], 0
    // Predicated region
    $region2: #{tpu_custom_call.1} parent=1 // pred_check
      _
    $region3: #{tpu_custom_call.1} parent=1 // pred_check_branch
      %19 = sbr.rel (0) target = $region5
    $region4: #{tpu_custom_call.1} parent=1 // pred_region
      _
    $region5: #{tpu_custom_call.1} parent=1 // pred_fallthru
      _
    // Predicated region
    $region6: #{tpu_custom_call.1} parent=1 // pred_check
      _
    $region7: #{tpu_custom_call.1} parent=1 // pred_check_branch
      %21 = sbr.rel (0) target = $region9
    $region8: #{tpu_custom_call.1} parent=1 // pred_region
      _
    $region9: #{tpu_custom_call.1} parent=1 // pred_fallthru
      _
    // Predicated region
    $region10: #{tpu_custom_call.1} parent=1 // pred_check
      _
    $region11: #{tpu_custom_call.1} parent=1 // pred_check_branch
      %23 = sbr.rel (0) target = $region13
    $region12: #{tpu_custom_call.1} parent=1 // pred_region
      %25 = vsyncadd [#allocation3], 0
      %s27 = sshll.u32 %s2, 4
      %s28 = int_to_ptr.hbm [resolvable:$true] %s27
      %s29 = sshll.u32 [#allocation2], 4
      %s30 = int_to_ptr.vmem [resolvable:$true] %s29
      %32 = dma.hbm_to_vmem [thread:$0]  %s28, 64, %s30, [#allocation3]
    $region13: #{tpu_custom_call.1} parent=1 // pred_fallthru
      _
    // Predicated region
    $region14: #{tpu_custom_call.1} parent=1 // pred_check
      _
    $region15: #{tpu_custom_call.1} parent=1 // pred_check_branch
      %34 = sbr.rel (0) target = $region17
    $region16: #{tpu_custom_call.1} parent=1 // pred_region
      %36 = vsyncadd [#allocation5], 0
      %s37 = sshll.u32 %s3, 4
      %s38 = int_to_ptr.hbm [resolvable:$true] %s37
      %s39 = sshll.u32 [#allocation4], 4
      %s40 = int_to_ptr.vmem [resolvable:$true] %s39
      %45 = dma.hbm_to_vmem [thread:$0]  %s38, 4096, %s40, [#allocation5], 256, 256, 16
    $region17: #{tpu_custom_call.1} parent=1 // pred_fallthru
      _
    // Predicated region
    $region18: #{tpu_custom_call.1} parent=1 // pred_check
      _
    $region19: #{tpu_custom_call.1} parent=1 // pred_check_branch
      %47 = sbr.rel (0) target = $region21
    $region20: #{tpu_custom_call.1} parent=1 // pred_region
      %49 = vsyncadd [#allocation5], 0
      %s50 = sshll.u32 %s4, 4
      %s51 = int_to_ptr.hbm [resolvable:$true] %s50
      %s52 = sshll.u32 [#allocation6], 4
      %s53 = int_to_ptr.vmem [resolvable:$true] %s52
      %58 = dma.hbm_to_vmem [thread:$0]  %s51, 1024, %s53, [#allocation5], 64, 64, 4
    $region21: #{tpu_custom_call.1} parent=1 // pred_fallthru
      _
    // Predicated region
    $region22: #{tpu_custom_call.1} parent=1 // pred_check
      _
    $region23: #{tpu_custom_call.1} parent=1 // pred_check_branch
      %60 = sbr.rel (0) target = $region25
    $region24: #{tpu_custom_call.1} parent=1 // pred_region
      _
    $region25: #{tpu_custom_call.1} parent=1 // pred_fallthru
      _
    // Predicated region
    $region26: #{tpu_custom_call.1} parent=1 // pred_check
      _
    $region27: #{tpu_custom_call.1} parent=1 // pred_check_branch
      %62 = sbr.rel (0) target = $region29
    $region28: #{tpu_custom_call.1} parent=1 // pred_region
      %64 = vsyncadd [#allocation8], 0
      %s65 = sshll.u32 %s6, 4
      %s66 = int_to_ptr.hbm [resolvable:$true] %s65
      %s67 = sshll.u32 [#allocation7], 4
      %s68 = int_to_ptr.vmem [resolvable:$true] %s67
      %73 = dma.hbm_to_vmem [thread:$0]  %s66, 2048, %s68, [#allocation8], 128, 128, 8
    $region29: #{tpu_custom_call.1} parent=1 // pred_fallthru
      _
    // Predicated region
    $region30: #{tpu_custom_call.1} parent=1 // pred_check
      _
    $region31: #{tpu_custom_call.1} parent=1 // pred_check_branch
      %75 = sbr.rel (0) target = $region33
    $region32: #{tpu_custom_call.1} parent=1 // pred_region
      _
    $region33: #{tpu_custom_call.1} parent=1 // pred_fallthru
      _
    // Predicated region
    $region34: #{tpu_custom_call.1} parent=1 // pred_check
      _
    $region35: #{tpu_custom_call.1} parent=1 // pred_check_branch
      %77 = sbr.rel (0) target = $region37
    $region36: #{tpu_custom_call.1} parent=1 // pred_region
      _
    $region37: #{tpu_custom_call.1} parent=1 // pred_fallthru
      _
    // Predicated region
    $region38: #{tpu_custom_call.1} parent=1 // pred_check
      _
    $region39: #{tpu_custom_call.1} parent=1 // pred_check_branch
      %79 = sbr.rel (0) target = $region41
    $region40: #{tpu_custom_call.1} parent=1 // pred_region
      _
    $region41: #{tpu_custom_call.1} parent=1 // pred_fallthru
      _
    // Predicated region
    $region42: #{tpu_custom_call.1} parent=1 // pred_check
      _
    $region43: #{tpu_custom_call.1} parent=1 // pred_check_branch
      %81 = sbr.rel (0) target = $region45
    $region44: #{tpu_custom_call.1} parent=1 // pred_region
      %83 = dma.done [#allocation3], 64
    $region45: #{tpu_custom_call.1} parent=1 // pred_fallthru
      _
    // Predicated region
    $region46: #{tpu_custom_call.1} parent=1 // pred_check
      _
    $region47: #{tpu_custom_call.1} parent=1 // pred_check_branch
      %85 = sbr.rel (0) target = $region49
    $region48: #{tpu_custom_call.1} parent=1 // pred_region
      %87 = dma.done [#allocation5], 4096
    $region49: #{tpu_custom_call.1} parent=1 // pred_fallthru
      _
    // Predicated region
    $region50: #{tpu_custom_call.1} parent=1 // pred_check
      _
    $region51: #{tpu_custom_call.1} parent=1 // pred_check_branch
      %89 = sbr.rel (0) target = $region53
    $region52: #{tpu_custom_call.1} parent=1 // pred_region
      %91 = dma.done [#allocation5], 1024
    $region53: #{tpu_custom_call.1} parent=1 // pred_fallthru
      _
    // Predicated region
    $region54: #{tpu_custom_call.1} parent=1 // pred_check
      _
    $region55: #{tpu_custom_call.1} parent=1 // pred_check_branch
      %93 = sbr.rel (0) target = $region57
    $region56: #{tpu_custom_call.1} parent=1 // pred_region
      %95 = dma.done [#allocation8], 2048
    $region57: #{tpu_custom_call.1} parent=1 // pred_fallthru
      _
    %v97 = vld [vmem:[#allocation2] sm:$0xf]
    %v98 = vld [vmem:[%s0] sm:$0xff]
    %100 = vset.pattern.permute.xlu0 0
    %101 = vperm.xlu0 %100, %v98
    %v102 = vpop.permute.xlu0 %101
    %v105 = vperm.slane %v97, 0
    %v106 = vperm.slane %v97, 1
    %v107 = vperm.slane %v97, 2
    %v108 = vperm.slane %v97, 3
    %v113 = vmul.f32 %v102, %v105
    %v114 = vmul.f32 %v102, %v106
    %v115 = vmul.f32 %v102, %v107
    %v116 = vmul.f32 %v102, %v108
    %v117 = vld [vmem:[#allocation4] sm:$0xff]
    %v118 = vld [vmem:[#allocation4 + $0x8] sm:$0xff]
    %v119 = vld [vmem:[#allocation4 + $0x10] sm:$0xff]
    %v120 = vld [vmem:[#allocation4 + $0x18] sm:$0xff]
    %v121 = vld [vmem:[#allocation4 + $0x20] sm:$0xff]
    %v122 = vld [vmem:[#allocation4 + $0x28] sm:$0xff]
    %v123 = vld [vmem:[#allocation4 + $0x30] sm:$0xff]
    %v124 = vld [vmem:[#allocation4 + $0x38] sm:$0xff]
    %v125 = vld [vmem:[#allocation4 + $0x40] sm:$0xff]
    %v126 = vld [vmem:[#allocation4 + $0x48] sm:$0xff]
    %v127 = vld [vmem:[#allocation4 + $0x50] sm:$0xff]
    %v128 = vld [vmem:[#allocation4 + $0x58] sm:$0xff]
    %v129 = vld [vmem:[#allocation4 + $0x60] sm:$0xff]
    %v130 = vld [vmem:[#allocation4 + $0x68] sm:$0xff]
    %v131 = vld [vmem:[#allocation4 + $0x70] sm:$0xff]
    %v132 = vld [vmem:[#allocation4 + $0x78] sm:$0xff]
    %v133 = vld [vmem:[#allocation4 + $0x80] sm:$0xff]
    %v134 = vld [vmem:[#allocation4 + $0x88] sm:$0xff]
    %v135 = vld [vmem:[#allocation4 + $0x90] sm:$0xff]
    %v136 = vld [vmem:[#allocation4 + $0x98] sm:$0xff]
    %v137 = vld [vmem:[#allocation4 + $0xa0] sm:$0xff]
    %v138 = vld [vmem:[#allocation4 + $0xa8] sm:$0xff]
    %v139 = vld [vmem:[#allocation4 + $0xb0] sm:$0xff]
    %v140 = vld [vmem:[#allocation4 + $0xb8] sm:$0xff]
    %v141 = vld [vmem:[#allocation4 + $0xc0] sm:$0xff]
    %v142 = vld [vmem:[#allocation4 + $0xc8] sm:$0xff]
    %v143 = vld [vmem:[#allocation4 + $0xd0] sm:$0xff]
    %v144 = vld [vmem:[#allocation4 + $0xd8] sm:$0xff]
    %v145 = vld [vmem:[#allocation4 + $0xe0] sm:$0xff]
    %v146 = vld [vmem:[#allocation4 + $0xe8] sm:$0xff]
    %v147 = vld [vmem:[#allocation4 + $0xf0] sm:$0xff]
    %v148 = vld [vmem:[#allocation4 + $0xf8] sm:$0xff]
    %v181 = vunpack.c.l.b16 %v117
    %v182 = vunpack.c.h.b16 %v117
    %v183 = vunpack.c.l.b16 %v118
    %v184 = vunpack.c.h.b16 %v118
    %v185 = vunpack.c.l.b16 %v119
    %v186 = vunpack.c.h.b16 %v119
    %v187 = vunpack.c.l.b16 %v120
    %v188 = vunpack.c.h.b16 %v120
    %v189 = vunpack.c.l.b16 %v121
    %v190 = vunpack.c.h.b16 %v121
    %v191 = vunpack.c.l.b16 %v122
    %v192 = vunpack.c.h.b16 %v122
    %v193 = vunpack.c.l.b16 %v123
    %v194 = vunpack.c.h.b16 %v123
    %v195 = vunpack.c.l.b16 %v124
    %v196 = vunpack.c.h.b16 %v124
    %v197 = vunpack.c.l.b16 %v125
    %v198 = vunpack.c.h.b16 %v125
    %v199 = vunpack.c.l.b16 %v126
    %v200 = vunpack.c.h.b16 %v126
    %v201 = vunpack.c.l.b16 %v127
    %v202 = vunpack.c.h.b16 %v127
    %v203 = vunpack.c.l.b16 %v128
    %v204 = vunpack.c.h.b16 %v128
    %v205 = vunpack.c.l.b16 %v129
    %v206 = vunpack.c.h.b16 %v129
    %v207 = vunpack.c.l.b16 %v130
    %v208 = vunpack.c.h.b16 %v130
    %v209 = vunpack.c.l.b16 %v131
    %v210 = vunpack.c.h.b16 %v131
    %v211 = vunpack.c.l.b16 %v132
    %v212 = vunpack.c.h.b16 %v132
    %v213 = vunpack.c.l.b16 %v133
    %v214 = vunpack.c.h.b16 %v133
    %v215 = vunpack.c.l.b16 %v134
    %v216 = vunpack.c.h.b16 %v134
    %v217 = vunpack.c.l.b16 %v135
    %v218 = vunpack.c.h.b16 %v135
    %v219 = vunpack.c.l.b16 %v136
    %v220 = vunpack.c.h.b16 %v136
    %v221 = vunpack.c.l.b16 %v137
    %v222 = vunpack.c.h.b16 %v137
    %v223 = vunpack.c.l.b16 %v138
    %v224 = vunpack.c.h.b16 %v138
    %v225 = vunpack.c.l.b16 %v139
    %v226 = vunpack.c.h.b16 %v139
    %v227 = vunpack.c.l.b16 %v140
    %v228 = vunpack.c.h.b16 %v140
    %v229 = vunpack.c.l.b16 %v141
    %v230 = vunpack.c.h.b16 %v141
    %v231 = vunpack.c.l.b16 %v142
    %v232 = vunpack.c.h.b16 %v142
    %v233 = vunpack.c.l.b16 %v143
    %v234 = vunpack.c.h.b16 %v143
    %v235 = vunpack.c.l.b16 %v144
    %v236 = vunpack.c.h.b16 %v144
    %v237 = vunpack.c.l.b16 %v145
    %v238 = vunpack.c.h.b16 %v145
    %v239 = vunpack.c.l.b16 %v146
    %v240 = vunpack.c.h.b16 %v146
    %v241 = vunpack.c.l.b16 %v147
    %v242 = vunpack.c.h.b16 %v147
    %v243 = vunpack.c.l.b16 %v148
    %v244 = vunpack.c.h.b16 %v148
    %v245 = vpack.c.b16 %v185, %v181
    %v246 = vpack.c.b16 %v186, %v182
    %v247 = vpack.c.b16 %v187, %v183
    %v248 = vpack.c.b16 %v188, %v184
    %v249 = vpack.c.b16 %v193, %v189
    %v250 = vpack.c.b16 %v194, %v190
    %v251 = vpack.c.b16 %v195, %v191
    %v252 = vpack.c.b16 %v196, %v192
    %v253 = vpack.c.b16 %v201, %v197
    %v254 = vpack.c.b16 %v202, %v198
    %v255 = vpack.c.b16 %v203, %v199
    %v256 = vpack.c.b16 %v204, %v200
    %v257 = vpack.c.b16 %v209, %v205
    %v258 = vpack.c.b16 %v210, %v206
    %v259 = vpack.c.b16 %v211, %v207
    %v260 = vpack.c.b16 %v212, %v208
    %v261 = vpack.c.b16 %v217, %v213
    %v262 = vpack.c.b16 %v218, %v214
    %v263 = vpack.c.b16 %v219, %v215
    %v264 = vpack.c.b16 %v220, %v216
    %v265 = vpack.c.b16 %v225, %v221
    %v266 = vpack.c.b16 %v226, %v222
    %v267 = vpack.c.b16 %v227, %v223
    %v268 = vpack.c.b16 %v228, %v224
    %v269 = vpack.c.b16 %v233, %v229
    %v270 = vpack.c.b16 %v234, %v230
    %v271 = vpack.c.b16 %v235, %v231
    %v272 = vpack.c.b16 %v236, %v232
    %v273 = vpack.c.b16 %v241, %v237
    %v274 = vpack.c.b16 %v242, %v238
    %v275 = vpack.c.b16 %v243, %v239
    %v276 = vpack.c.b16 %v244, %v240
    %309 = vmatpush.bf16.msra.mxu0 %v273
    %310 = vmatpush.bf16.msra.mxu0 %v269
    %311 = vmatpush.bf16.msra.mxu0 %v265
    %312 = vmatpush.bf16.msra.mxu0 %v261
    %313 = vmatpush.bf16.msra.mxu0 %v257
    %314 = vmatpush.bf16.msra.mxu0 %v253
    %315 = vmatpush.bf16.msra.mxu0 %v249
    %316 = vmatpush.bf16.msra.mxu0 %v245
    %317 = vmatmul.bf16.gmra.mxu0 0
    %v318 = vpop.f32.mrf.mxu0
    %v319 = vadd.f32 0.0, %v318
    %v320 = vpop.f32.mrf.mxu0
    %321 = vdwg.mxu0
    %322 = vmatpush.bf16.msra.mxu0 %v274
    %323 = vmatpush.bf16.msra.mxu0 %v270
    %324 = vmatpush.bf16.msra.mxu0 %v266
    %325 = vmatpush.bf16.msra.mxu0 %v262
    %326 = vmatpush.bf16.msra.mxu0 %v258
    %327 = vmatpush.bf16.msra.mxu0 %v254
    %328 = vmatpush.bf16.msra.mxu0 %v250
    %329 = vmatpush.bf16.msra.mxu0 %v246
    %330 = vmatmul.bf16.gmra.mxu0 0
    %v331 = vpop.f32.mrf.mxu0
    %v332 = vadd.f32 0.0, %v331
    %v333 = vpop.f32.mrf.mxu0
    %334 = vdwg.mxu0
    %335 = vmatpush.bf16.msra.mxu0 %v275
    %336 = vmatpush.bf16.msra.mxu0 %v271
    %337 = vmatpush.bf16.msra.mxu0 %v267
    %338 = vmatpush.bf16.msra.mxu0 %v263
    %339 = vmatpush.bf16.msra.mxu0 %v259
    %340 = vmatpush.bf16.msra.mxu0 %v255
    %341 = vmatpush.bf16.msra.mxu0 %v251
    %342 = vmatpush.bf16.msra.mxu0 %v247
    %343 = vmatmul.bf16.gmra.mxu0 0
    %v344 = vpop.f32.mrf.mxu0
    %v345 = vadd.f32 0.0, %v344
    %v346 = vpop.f32.mrf.mxu0
    %347 = vdwg.mxu0
    %348 = vmatpush.bf16.msra.mxu0 %v276
    %349 = vmatpush.bf16.msra.mxu0 %v272
    %350 = vmatpush.bf16.msra.mxu0 %v268
    %351 = vmatpush.bf16.msra.mxu0 %v264
    %352 = vmatpush.bf16.msra.mxu0 %v260
    %353 = vmatpush.bf16.msra.mxu0 %v256
    %354 = vmatpush.bf16.msra.mxu0 %v252
    %355 = vmatpush.bf16.msra.mxu0 %v248
    %356 = vmatmul.bf16.gmra.mxu0 0
    %v357 = vpop.f32.mrf.mxu0
    %v358 = vadd.f32 0.0, %v357
    %v359 = vpop.f32.mrf.mxu0
    %360 = vdwg.mxu0
    %v361 = vadd.f32 %v113, %v319
    %v362 = vadd.f32 %v114, %v332
    %v363 = vadd.f32 %v115, %v345
    %v364 = vadd.f32 %v116, %v358
    %v365 = vmul.f32 %v361, 0.5
    %v366 = vmul.f32 %v362, 0.5
    %v367 = vmul.f32 %v363, 0.5
    %v368 = vtanh.pop %v365
    %v369 = vtanh.pop %v366
    %v370 = vtanh.pop %v367
    %v371 = vmul.f32 %v368, 0.5
    %v372 = vmul.f32 %v369, 0.5
    %v373 = vmul.f32 %v370, 0.5
    %v374 = vadd.f32 %v371, 0.5
    %v375 = vadd.f32 %v372, 0.5
    %v376 = vadd.f32 %v373, 0.5
    %v377 = vtanh.pop %v364
    %v378 = vmul.f32 %v375, 0.0
    %v379 = vmul.f32 %v374, %v377
    %v380 = vadd.f32 %v378, %v379
    %v381 = vtanh.pop %v380
    %v382 = vmul.f32 %v376, %v381
    %383 = vset.pattern.permute.xlu0 1
    %384 = vperm.xlu0 %383, %v98
    %v385 = vpop.permute.xlu0 %384
    %v387 = vmul.f32 %v385, %v105
    %v388 = vmul.f32 %v385, %v106
    %v389 = vmul.f32 %v385, %v107
    %v390 = vmul.f32 %v385, %v108
    %v391 = vpack.c.bf16 %v382, %v382
    %392 = vmatpush.bf16.msra.mxu0 %v273
    %393 = vmatpush.bf16.msra.mxu0 %v269
    %394 = vmatpush.bf16.msra.mxu0 %v265
    %395 = vmatpush.bf16.msra.mxu0 %v261
    %396 = vmatpush.bf16.msra.mxu0 %v257
    %397 = vmatpush.bf16.msra.mxu0 %v253
    %398 = vmatpush.bf16.msra.mxu0 %v249
    %399 = vmatpush.bf16.msra.mxu0 %v245
    %400 = vmatmul.bf16.gmra.mxu0 %v391
    %v401 = vpop.f32.mrf.mxu0
    %v402 = vadd.f32 0.0, %v401
    %v403 = vpop.f32.mrf.mxu0
    %404 = vdwg.mxu0
    %405 = vmatpush.bf16.msra.mxu0 %v274
    %406 = vmatpush.bf16.msra.mxu0 %v270
    %407 = vmatpush.bf16.msra.mxu0 %v266
    %408 = vmatpush.bf16.msra.mxu0 %v262
    %409 = vmatpush.bf16.msra.mxu0 %v258
    %410 = vmatpush.bf16.msra.mxu0 %v254
    %411 = vmatpush.bf16.msra.mxu0 %v250
    %412 = vmatpush.bf16.msra.mxu0 %v246
    %413 = vmatmul.bf16.gmra.mxu0 %v391
    %v414 = vpop.f32.mrf.mxu0
    %v415 = vadd.f32 0.0, %v414
    %v416 = vpop.f32.mrf.mxu0
    %417 = vdwg.mxu0
    %418 = vmatpush.bf16.msra.mxu0 %v275
    %419 = vmatpush.bf16.msra.mxu0 %v271
    %420 = vmatpush.bf16.msra.mxu0 %v267
    %421 = vmatpush.bf16.msra.mxu0 %v263
    %422 = vmatpush.bf16.msra.mxu0 %v259
    %423 = vmatpush.bf16.msra.mxu0 %v255
    %424 = vmatpush.bf16.msra.mxu0 %v251
    %425 = vmatpush.bf16.msra.mxu0 %v247
    %426 = vmatmul.bf16.gmra.mxu0 %v391
    %v427 = vpop.f32.mrf.mxu0
    %v428 = vadd.f32 0.0, %v427
    %v429 = vpop.f32.mrf.mxu0
    %430 = vdwg.mxu0
    %431 = vmatpush.bf16.msra.mxu0 %v276
    %432 = vmatpush.bf16.msra.mxu0 %v272
    %433 = vmatpush.bf16.msra.mxu0 %v268
    %434 = vmatpush.bf16.msra.mxu0 %v264
    %435 = vmatpush.bf16.msra.mxu0 %v260
    %436 = vmatpush.bf16.msra.mxu0 %v256
    %437 = vmatpush.bf16.msra.mxu0 %v252
    %438 = vmatpush.bf16.msra.mxu0 %v248
    %439 = vmatmul.bf16.gmra.mxu0 %v391
    %v440 = vpop.f32.mrf.mxu0
    %v441 = vadd.f32 0.0, %v440
    %v442 = vpop.f32.mrf.mxu0
    %443 = vdwg.mxu0
    %v444 = vadd.f32 %v387, %v402
    %v445 = vadd.f32 %v388, %v415
    %v446 = vadd.f32 %v389, %v428
    %v447 = vadd.f32 %v390, %v441
    %v448 = vmul.f32 %v444, 0.5
    %v449 = vmul.f32 %v445, 0.5
    %v450 = vmul.f32 %v446, 0.5
    %v451 = vtanh.pop %v448
    %v452 = vtanh.pop %v449
    %v453 = vtanh.pop %v450
    %v454 = vmul.f32 %v451, 0.5
    %v455 = vmul.f32 %v452, 0.5
    %v456 = vmul.f32 %v453, 0.5
    %v457 = vadd.f32 %v454, 0.5
    %v458 = vadd.f32 %v455, 0.5
    %v459 = vadd.f32 %v456, 0.5
    %v460 = vtanh.pop %v447
    %v461 = vmul.f32 %v458, %v380
    %v462 = vmul.f32 %v457, %v460
    %v463 = vadd.f32 %v461, %v462
    %v464 = vtanh.pop %v463
    %v465 = vmul.f32 %v459, %v464
    %466 = vset.pattern.permute.xlu0 2
    %467 = vperm.xlu0 %466, %v98
    %v468 = vpop.permute.xlu0 %467
    %v470 = vmul.f32 %v468, %v105
    %v471 = vmul.f32 %v468, %v106
    %v472 = vmul.f32 %v468, %v107
    %v473 = vmul.f32 %v468, %v108
    %v474 = vpack.c.bf16 %v465, %v465
    %475 = vmatpush.bf16.msra.mxu0 %v273
    %476 = vmatpush.bf16.msra.mxu0 %v269
    %477 = vmatpush.bf16.msra.mxu0 %v265
    %478 = vmatpush.bf16.msra.mxu0 %v261
    %479 = vmatpush.bf16.msra.mxu0 %v257
    %480 = vmatpush.bf16.msra.mxu0 %v253
    %481 = vmatpush.bf16.msra.mxu0 %v249
    %482 = vmatpush.bf16.msra.mxu0 %v245
    %483 = vmatmul.bf16.gmra.mxu0 %v474
    %v484 = vpop.f32.mrf.mxu0
    %v485 = vadd.f32 0.0, %v484
    %v486 = vpop.f32.mrf.mxu0
    %487 = vdwg.mxu0
    %488 = vmatpush.bf16.msra.mxu0 %v274
    %489 = vmatpush.bf16.msra.mxu0 %v270
    %490 = vmatpush.bf16.msra.mxu0 %v266
    %491 = vmatpush.bf16.msra.mxu0 %v262
    %492 = vmatpush.bf16.msra.mxu0 %v258
    %493 = vmatpush.bf16.msra.mxu0 %v254
    %494 = vmatpush.bf16.msra.mxu0 %v250
    %495 = vmatpush.bf16.msra.mxu0 %v246
    %496 = vmatmul.bf16.gmra.mxu0 %v474
    %v497 = vpop.f32.mrf.mxu0
    %v498 = vadd.f32 0.0, %v497
    %v499 = vpop.f32.mrf.mxu0
    %500 = vdwg.mxu0
    %501 = vmatpush.bf16.msra.mxu0 %v275
    %502 = vmatpush.bf16.msra.mxu0 %v271
    %503 = vmatpush.bf16.msra.mxu0 %v267
    %504 = vmatpush.bf16.msra.mxu0 %v263
    %505 = vmatpush.bf16.msra.mxu0 %v259
    %506 = vmatpush.bf16.msra.mxu0 %v255
    %507 = vmatpush.bf16.msra.mxu0 %v251
    %508 = vmatpush.bf16.msra.mxu0 %v247
    %509 = vmatmul.bf16.gmra.mxu0 %v474
    %v510 = vpop.f32.mrf.mxu0
    %v511 = vadd.f32 0.0, %v510
    %v512 = vpop.f32.mrf.mxu0
    %513 = vdwg.mxu0
    %514 = vmatpush.bf16.msra.mxu0 %v276
    %515 = vmatpush.bf16.msra.mxu0 %v272
    %516 = vmatpush.bf16.msra.mxu0 %v268
    %517 = vmatpush.bf16.msra.mxu0 %v264
    %518 = vmatpush.bf16.msra.mxu0 %v260
    %519 = vmatpush.bf16.msra.mxu0 %v256
    %520 = vmatpush.bf16.msra.mxu0 %v252
    %521 = vmatpush.bf16.msra.mxu0 %v248
    %522 = vmatmul.bf16.gmra.mxu0 %v474
    %v523 = vpop.f32.mrf.mxu0
    %v524 = vadd.f32 0.0, %v523
    %v525 = vpop.f32.mrf.mxu0
    %526 = vdwg.mxu0
    %v527 = vadd.f32 %v470, %v485
    %v528 = vadd.f32 %v471, %v498
    %v529 = vadd.f32 %v472, %v511
    %v530 = vadd.f32 %v473, %v524
    %v531 = vmul.f32 %v527, 0.5
    %v532 = vmul.f32 %v528, 0.5
    %v533 = vmul.f32 %v529, 0.5
    %v534 = vtanh.pop %v531
    %v535 = vtanh.pop %v532
    %v536 = vtanh.pop %v533
    %v537 = vmul.f32 %v534, 0.5
    %v538 = vmul.f32 %v535, 0.5
    %v539 = vmul.f32 %v536, 0.5
    %v540 = vadd.f32 %v537, 0.5
    %v541 = vadd.f32 %v538, 0.5
    %v542 = vadd.f32 %v539, 0.5
    %v543 = vtanh.pop %v530
    %v544 = vmul.f32 %v541, %v463
    %v545 = vmul.f32 %v540, %v543
    %v546 = vadd.f32 %v544, %v545
    %v547 = vtanh.pop %v546
    %v548 = vmul.f32 %v542, %v547
    %549 = vset.pattern.permute.xlu0 3
    %550 = vperm.xlu0 %549, %v98
    %v551 = vpop.permute.xlu0 %550
    %v553 = vmul.f32 %v551, %v105
    %v554 = vmul.f32 %v551, %v106
    %v555 = vmul.f32 %v551, %v107
    %v556 = vmul.f32 %v551, %v108
    %v557 = vpack.c.bf16 %v548, %v548
    %558 = vmatpush.bf16.msra.mxu0 %v273
    %559 = vmatpush.bf16.msra.mxu0 %v269
    %560 = vmatpush.bf16.msra.mxu0 %v265
    %561 = vmatpush.bf16.msra.mxu0 %v261
    %562 = vmatpush.bf16.msra.mxu0 %v257
    %563 = vmatpush.bf16.msra.mxu0 %v253
    %564 = vmatpush.bf16.msra.mxu0 %v249
    %565 = vmatpush.bf16.msra.mxu0 %v245
    %566 = vmatmul.bf16.gmra.mxu0 %v557
    %v567 = vpop.f32.mrf.mxu0
    %v568 = vadd.f32 0.0, %v567
    %v569 = vpop.f32.mrf.mxu0
    %570 = vdwg.mxu0
    %571 = vmatpush.bf16.msra.mxu0 %v274
    %572 = vmatpush.bf16.msra.mxu0 %v270
    %573 = vmatpush.bf16.msra.mxu0 %v266
    %574 = vmatpush.bf16.msra.mxu0 %v262
    %575 = vmatpush.bf16.msra.mxu0 %v258
    %576 = vmatpush.bf16.msra.mxu0 %v254
    %577 = vmatpush.bf16.msra.mxu0 %v250
    %578 = vmatpush.bf16.msra.mxu0 %v246
    %579 = vmatmul.bf16.gmra.mxu0 %v557
    %v580 = vpop.f32.mrf.mxu0
    %v581 = vadd.f32 0.0, %v580
    %v582 = vpop.f32.mrf.mxu0
    %583 = vdwg.mxu0
    %584 = vmatpush.bf16.msra.mxu0 %v275
    %585 = vmatpush.bf16.msra.mxu0 %v271
    %586 = vmatpush.bf16.msra.mxu0 %v267
    %587 = vmatpush.bf16.msra.mxu0 %v263
    %588 = vmatpush.bf16.msra.mxu0 %v259
    %589 = vmatpush.bf16.msra.mxu0 %v255
    %590 = vmatpush.bf16.msra.mxu0 %v251
    %591 = vmatpush.bf16.msra.mxu0 %v247
    %592 = vmatmul.bf16.gmra.mxu0 %v557
    %v593 = vpop.f32.mrf.mxu0
    %v594 = vadd.f32 0.0, %v593
    %v595 = vpop.f32.mrf.mxu0
    %596 = vdwg.mxu0
    %597 = vmatpush.bf16.msra.mxu0 %v276
    %598 = vmatpush.bf16.msra.mxu0 %v272
    %599 = vmatpush.bf16.msra.mxu0 %v268
    %600 = vmatpush.bf16.msra.mxu0 %v264
    %601 = vmatpush.bf16.msra.mxu0 %v260
    %602 = vmatpush.bf16.msra.mxu0 %v256
    %603 = vmatpush.bf16.msra.mxu0 %v252
    %604 = vmatpush.bf16.msra.mxu0 %v248
    %605 = vmatmul.bf16.gmra.mxu0 %v557
    %v606 = vpop.f32.mrf.mxu0
    %v607 = vadd.f32 0.0, %v606
    %v608 = vpop.f32.mrf.mxu0
    %609 = vdwg.mxu0
    %v610 = vadd.f32 %v553, %v568
    %v611 = vadd.f32 %v554, %v581
    %v612 = vadd.f32 %v555, %v594
    %v613 = vadd.f32 %v556, %v607
    %v614 = vmul.f32 %v610, 0.5
    %v615 = vmul.f32 %v611, 0.5
    %v616 = vmul.f32 %v612, 0.5
    %v617 = vtanh.pop %v614
    %v618 = vtanh.pop %v615
    %v619 = vtanh.pop %v616
    %v620 = vmul.f32 %v617, 0.5
    %v621 = vmul.f32 %v618, 0.5
    %v622 = vmul.f32 %v619, 0.5
    %v623 = vadd.f32 %v620, 0.5
    %v624 = vadd.f32 %v621, 0.5
    %v625 = vadd.f32 %v622, 0.5
    %v626 = vtanh.pop %v613
    %v627 = vmul.f32 %v624, %v546
    %v628 = vmul.f32 %v623, %v626
    %v629 = vadd.f32 %v627, %v628
    %v630 = vtanh.pop %v629
    %v631 = vmul.f32 %v625, %v630
    %632 = vset.pattern.permute.xlu0 4
    %633 = vperm.xlu0 %632, %v98
    %v634 = vpop.permute.xlu0 %633
    %v636 = vmul.f32 %v634, %v105
    %v637 = vmul.f32 %v634, %v106
    %v638 = vmul.f32 %v634, %v107
    %v639 = vmul.f32 %v634, %v108
    %v640 = vpack.c.bf16 %v631, %v631
    %641 = vmatpush.bf16.msra.mxu0 %v273
    %642 = vmatpush.bf16.msra.mxu0 %v269
    %643 = vmatpush.bf16.msra.mxu0 %v265
    %644 = vmatpush.bf16.msra.mxu0 %v261
    %645 = vmatpush.bf16.msra.mxu0 %v257
    %646 = vmatpush.bf16.msra.mxu0 %v253
    %647 = vmatpush.bf16.msra.mxu0 %v249
    %648 = vmatpush.bf16.msra.mxu0 %v245
    %649 = vmatmul.bf16.gmra.mxu0 %v640
    %v650 = vpop.f32.mrf.mxu0
    %v651 = vadd.f32 0.0, %v650
    %v652 = vpop.f32.mrf.mxu0
    %653 = vdwg.mxu0
    %654 = vmatpush.bf16.msra.mxu0 %v274
    %655 = vmatpush.bf16.msra.mxu0 %v270
    %656 = vmatpush.bf16.msra.mxu0 %v266
    %657 = vmatpush.bf16.msra.mxu0 %v262
    %658 = vmatpush.bf16.msra.mxu0 %v258
    %659 = vmatpush.bf16.msra.mxu0 %v254
    %660 = vmatpush.bf16.msra.mxu0 %v250
    %661 = vmatpush.bf16.msra.mxu0 %v246
    %662 = vmatmul.bf16.gmra.mxu0 %v640
    %v663 = vpop.f32.mrf.mxu0
    %v664 = vadd.f32 0.0, %v663
    %v665 = vpop.f32.mrf.mxu0
    %666 = vdwg.mxu0
    %667 = vmatpush.bf16.msra.mxu0 %v275
    %668 = vmatpush.bf16.msra.mxu0 %v271
    %669 = vmatpush.bf16.msra.mxu0 %v267
    %670 = vmatpush.bf16.msra.mxu0 %v263
    %671 = vmatpush.bf16.msra.mxu0 %v259
    %672 = vmatpush.bf16.msra.mxu0 %v255
    %673 = vmatpush.bf16.msra.mxu0 %v251
    %674 = vmatpush.bf16.msra.mxu0 %v247
    %675 = vmatmul.bf16.gmra.mxu0 %v640
    %v676 = vpop.f32.mrf.mxu0
    %v677 = vadd.f32 0.0, %v676
    %v678 = vpop.f32.mrf.mxu0
    %679 = vdwg.mxu0
    %680 = vmatpush.bf16.msra.mxu0 %v276
    %681 = vmatpush.bf16.msra.mxu0 %v272
    %682 = vmatpush.bf16.msra.mxu0 %v268
    %683 = vmatpush.bf16.msra.mxu0 %v264
    %684 = vmatpush.bf16.msra.mxu0 %v260
    %685 = vmatpush.bf16.msra.mxu0 %v256
    %686 = vmatpush.bf16.msra.mxu0 %v252
    %687 = vmatpush.bf16.msra.mxu0 %v248
    %688 = vmatmul.bf16.gmra.mxu0 %v640
    %v689 = vpop.f32.mrf.mxu0
    %v690 = vadd.f32 0.0, %v689
    %v691 = vpop.f32.mrf.mxu0
    %692 = vdwg.mxu0
    %v693 = vadd.f32 %v636, %v651
    %v694 = vadd.f32 %v637, %v664
    %v695 = vadd.f32 %v638, %v677
    %v696 = vadd.f32 %v639, %v690
    %v697 = vmul.f32 %v693, 0.5
    %v698 = vmul.f32 %v694, 0.5
    %v699 = vmul.f32 %v695, 0.5
    %v700 = vtanh.pop %v697
    %v701 = vtanh.pop %v698
    %v702 = vtanh.pop %v699
    %v703 = vmul.f32 %v700, 0.5
    %v704 = vmul.f32 %v701, 0.5
    %v705 = vmul.f32 %v702, 0.5
    %v706 = vadd.f32 %v703, 0.5
    %v707 = vadd.f32 %v704, 0.5
    %v708 = vadd.f32 %v705, 0.5
    %v709 = vtanh.pop %v696
    %v710 = vmul.f32 %v707, %v629
    %v711 = vmul.f32 %v706, %v709
    %v712 = vadd.f32 %v710, %v711
    %v713 = vtanh.pop %v712
    %v714 = vmul.f32 %v708, %v713
    %715 = vset.pattern.permute.xlu0 5
    %716 = vperm.xlu0 %715, %v98
    %v717 = vpop.permute.xlu0 %716
    %v719 = vmul.f32 %v717, %v105
    %v720 = vmul.f32 %v717, %v106
    %v721 = vmul.f32 %v717, %v107
    %v722 = vmul.f32 %v717, %v108
    %v723 = vpack.c.bf16 %v714, %v714
    %724 = vmatpush.bf16.msra.mxu0 %v273
    %725 = vmatpush.bf16.msra.mxu0 %v269
    %726 = vmatpush.bf16.msra.mxu0 %v265
    %727 = vmatpush.bf16.msra.mxu0 %v261
    %728 = vmatpush.bf16.msra.mxu0 %v257
    %729 = vmatpush.bf16.msra.mxu0 %v253
    %730 = vmatpush.bf16.msra.mxu0 %v249
    %731 = vmatpush.bf16.msra.mxu0 %v245
    %732 = vmatmul.bf16.gmra.mxu0 %v723
    %v733 = vpop.f32.mrf.mxu0
    %v734 = vadd.f32 0.0, %v733
    %v735 = vpop.f32.mrf.mxu0
    %736 = vdwg.mxu0
    %737 = vmatpush.bf16.msra.mxu0 %v274
    %738 = vmatpush.bf16.msra.mxu0 %v270
    %739 = vmatpush.bf16.msra.mxu0 %v266
    %740 = vmatpush.bf16.msra.mxu0 %v262
    %741 = vmatpush.bf16.msra.mxu0 %v258
    %742 = vmatpush.bf16.msra.mxu0 %v254
    %743 = vmatpush.bf16.msra.mxu0 %v250
    %744 = vmatpush.bf16.msra.mxu0 %v246
    %745 = vmatmul.bf16.gmra.mxu0 %v723
    %v746 = vpop.f32.mrf.mxu0
    %v747 = vadd.f32 0.0, %v746
    %v748 = vpop.f32.mrf.mxu0
    %749 = vdwg.mxu0
    %750 = vmatpush.bf16.msra.mxu0 %v275
    %751 = vmatpush.bf16.msra.mxu0 %v271
    %752 = vmatpush.bf16.msra.mxu0 %v267
    %753 = vmatpush.bf16.msra.mxu0 %v263
    %754 = vmatpush.bf16.msra.mxu0 %v259
    %755 = vmatpush.bf16.msra.mxu0 %v255
    %756 = vmatpush.bf16.msra.mxu0 %v251
    %757 = vmatpush.bf16.msra.mxu0 %v247
    %758 = vmatmul.bf16.gmra.mxu0 %v723
    %v759 = vpop.f32.mrf.mxu0
    %v760 = vadd.f32 0.0, %v759
    %v761 = vpop.f32.mrf.mxu0
    %762 = vdwg.mxu0
    %763 = vmatpush.bf16.msra.mxu0 %v276
    %764 = vmatpush.bf16.msra.mxu0 %v272
    %765 = vmatpush.bf16.msra.mxu0 %v268
    %766 = vmatpush.bf16.msra.mxu0 %v264
    %767 = vmatpush.bf16.msra.mxu0 %v260
    %768 = vmatpush.bf16.msra.mxu0 %v256
    %769 = vmatpush.bf16.msra.mxu0 %v252
    %770 = vmatpush.bf16.msra.mxu0 %v248
    %771 = vmatmul.bf16.gmra.mxu0 %v723
    %v772 = vpop.f32.mrf.mxu0
    %v773 = vadd.f32 0.0, %v772
    %v774 = vpop.f32.mrf.mxu0
    %775 = vdwg.mxu0
    %v776 = vadd.f32 %v719, %v734
    %v777 = vadd.f32 %v720, %v747
    %v778 = vadd.f32 %v721, %v760
    %v779 = vadd.f32 %v722, %v773
    %v780 = vmul.f32 %v776, 0.5
    %v781 = vmul.f32 %v777, 0.5
    %v782 = vmul.f32 %v778, 0.5
    %v783 = vtanh.pop %v780
    %v784 = vtanh.pop %v781
    %v785 = vtanh.pop %v782
    %v786 = vmul.f32 %v783, 0.5
    %v787 = vmul.f32 %v784, 0.5
    %v788 = vmul.f32 %v785, 0.5
    %v789 = vadd.f32 %v786, 0.5
    %v790 = vadd.f32 %v787, 0.5
    %v791 = vadd.f32 %v788, 0.5
    %v792 = vtanh.pop %v779
    %v793 = vmul.f32 %v790, %v712
    %v794 = vmul.f32 %v789, %v792
    %v795 = vadd.f32 %v793, %v794
    %v796 = vtanh.pop %v795
    %v797 = vmul.f32 %v791, %v796
    %798 = vset.pattern.permute.xlu0 6
    %799 = vperm.xlu0 %798, %v98
    %v800 = vpop.permute.xlu0 %799
    %v802 = vmul.f32 %v800, %v105
    %v803 = vmul.f32 %v800, %v106
    %v804 = vmul.f32 %v800, %v107
    %v805 = vmul.f32 %v800, %v108
    %v806 = vpack.c.bf16 %v797, %v797
    %807 = vmatpush.bf16.msra.mxu0 %v273
    %808 = vmatpush.bf16.msra.mxu0 %v269
    %809 = vmatpush.bf16.msra.mxu0 %v265
    %810 = vmatpush.bf16.msra.mxu0 %v261
    %811 = vmatpush.bf16.msra.mxu0 %v257
    %812 = vmatpush.bf16.msra.mxu0 %v253
    %813 = vmatpush.bf16.msra.mxu0 %v249
    %814 = vmatpush.bf16.msra.mxu0 %v245
    %815 = vmatmul.bf16.gmra.mxu0 %v806
    %v816 = vpop.f32.mrf.mxu0
    %v817 = vadd.f32 0.0, %v816
    %v818 = vpop.f32.mrf.mxu0
    %819 = vdwg.mxu0
    %820 = vmatpush.bf16.msra.mxu0 %v274
    %821 = vmatpush.bf16.msra.mxu0 %v270
    %822 = vmatpush.bf16.msra.mxu0 %v266
    %823 = vmatpush.bf16.msra.mxu0 %v262
    %824 = vmatpush.bf16.msra.mxu0 %v258
    %825 = vmatpush.bf16.msra.mxu0 %v254
    %826 = vmatpush.bf16.msra.mxu0 %v250
    %827 = vmatpush.bf16.msra.mxu0 %v246
    %828 = vmatmul.bf16.gmra.mxu0 %v806
    %v829 = vpop.f32.mrf.mxu0
    %v830 = vadd.f32 0.0, %v829
    %v831 = vpop.f32.mrf.mxu0
    %832 = vdwg.mxu0
    %833 = vmatpush.bf16.msra.mxu0 %v275
    %834 = vmatpush.bf16.msra.mxu0 %v271
    %835 = vmatpush.bf16.msra.mxu0 %v267
    %836 = vmatpush.bf16.msra.mxu0 %v263
    %837 = vmatpush.bf16.msra.mxu0 %v259
    %838 = vmatpush.bf16.msra.mxu0 %v255
    %839 = vmatpush.bf16.msra.mxu0 %v251
    %840 = vmatpush.bf16.msra.mxu0 %v247
    %841 = vmatmul.bf16.gmra.mxu0 %v806
    %v842 = vpop.f32.mrf.mxu0
    %v843 = vadd.f32 0.0, %v842
    %v844 = vpop.f32.mrf.mxu0
    %845 = vdwg.mxu0
    %846 = vmatpush.bf16.msra.mxu0 %v276
    %847 = vmatpush.bf16.msra.mxu0 %v272
    %848 = vmatpush.bf16.msra.mxu0 %v268
    %849 = vmatpush.bf16.msra.mxu0 %v264
    %850 = vmatpush.bf16.msra.mxu0 %v260
    %851 = vmatpush.bf16.msra.mxu0 %v256
    %852 = vmatpush.bf16.msra.mxu0 %v252
    %853 = vmatpush.bf16.msra.mxu0 %v248
    %854 = vmatmul.bf16.gmra.mxu0 %v806
    %v855 = vpop.f32.mrf.mxu0
    %v856 = vadd.f32 0.0, %v855
    %v857 = vpop.f32.mrf.mxu0
    %858 = vdwg.mxu0
    %v859 = vadd.f32 %v802, %v817
    %v860 = vadd.f32 %v803, %v830
    %v861 = vadd.f32 %v804, %v843
    %v862 = vadd.f32 %v805, %v856
    %v863 = vmul.f32 %v859, 0.5
    %v864 = vmul.f32 %v860, 0.5
    %v865 = vmul.f32 %v861, 0.5
    %v866 = vtanh.pop %v863
    %v867 = vtanh.pop %v864
    %v868 = vtanh.pop %v865
    %v869 = vmul.f32 %v866, 0.5
    %v870 = vmul.f32 %v867, 0.5
    %v871 = vmul.f32 %v868, 0.5
    %v872 = vadd.f32 %v869, 0.5
    %v873 = vadd.f32 %v870, 0.5
    %v874 = vadd.f32 %v871, 0.5
    %v875 = vtanh.pop %v862
    %v876 = vmul.f32 %v873, %v795
    %v877 = vmul.f32 %v872, %v875
    %v878 = vadd.f32 %v876, %v877
    %v879 = vtanh.pop %v878
    %v880 = vmul.f32 %v874, %v879
    %881 = vset.pattern.permute.xlu0 7
    %882 = vperm.xlu0 %881, %v98
    %v883 = vpop.permute.xlu0 %882
    %v885 = vmul.f32 %v883, %v105
    %v886 = vmul.f32 %v883, %v106
    %v887 = vmul.f32 %v883, %v107
    %v888 = vmul.f32 %v883, %v108
    %v889 = vpack.c.bf16 %v880, %v880
    %890 = vmatpush.bf16.msra.mxu0 %v273
    %891 = vmatpush.bf16.msra.mxu0 %v269
    %892 = vmatpush.bf16.msra.mxu0 %v265
    %893 = vmatpush.bf16.msra.mxu0 %v261
    %894 = vmatpush.bf16.msra.mxu0 %v257
    %895 = vmatpush.bf16.msra.mxu0 %v253
    %896 = vmatpush.bf16.msra.mxu0 %v249
    %897 = vmatpush.bf16.msra.mxu0 %v245
    %898 = vmatmul.bf16.gmra.mxu0 %v889
    %v899 = vpop.f32.mrf.mxu0
    %v900 = vadd.f32 0.0, %v899
    %v901 = vpop.f32.mrf.mxu0
    %902 = vdwg.mxu0
    %903 = vmatpush.bf16.msra.mxu0 %v274
    %904 = vmatpush.bf16.msra.mxu0 %v270
    %905 = vmatpush.bf16.msra.mxu0 %v266
    %906 = vmatpush.bf16.msra.mxu0 %v262
    %907 = vmatpush.bf16.msra.mxu0 %v258
    %908 = vmatpush.bf16.msra.mxu0 %v254
    %909 = vmatpush.bf16.msra.mxu0 %v250
    %910 = vmatpush.bf16.msra.mxu0 %v246
    %911 = vmatmul.bf16.gmra.mxu0 %v889
    %v912 = vpop.f32.mrf.mxu0
    %v913 = vadd.f32 0.0, %v912
    %v914 = vpop.f32.mrf.mxu0
    %915 = vdwg.mxu0
    %916 = vmatpush.bf16.msra.mxu0 %v275
    %917 = vmatpush.bf16.msra.mxu0 %v271
    %918 = vmatpush.bf16.msra.mxu0 %v267
    %919 = vmatpush.bf16.msra.mxu0 %v263
    %920 = vmatpush.bf16.msra.mxu0 %v259
    %921 = vmatpush.bf16.msra.mxu0 %v255
    %922 = vmatpush.bf16.msra.mxu0 %v251
    %923 = vmatpush.bf16.msra.mxu0 %v247
    %924 = vmatmul.bf16.gmra.mxu0 %v889
    %v925 = vpop.f32.mrf.mxu0
    %v926 = vadd.f32 0.0, %v925
    %v927 = vpop.f32.mrf.mxu0
    %928 = vdwg.mxu0
    %929 = vmatpush.bf16.msra.mxu0 %v276
    %930 = vmatpush.bf16.msra.mxu0 %v272
    %931 = vmatpush.bf16.msra.mxu0 %v268
    %932 = vmatpush.bf16.msra.mxu0 %v264
    %933 = vmatpush.bf16.msra.mxu0 %v260
    %934 = vmatpush.bf16.msra.mxu0 %v256
    %935 = vmatpush.bf16.msra.mxu0 %v252
    %936 = vmatpush.bf16.msra.mxu0 %v248
    %937 = vmatmul.bf16.gmra.mxu0 %v889
    %v938 = vpop.f32.mrf.mxu0
    %v939 = vadd.f32 0.0, %v938
    %v940 = vpop.f32.mrf.mxu0
    %941 = vdwg.mxu0
    %v942 = vadd.f32 %v885, %v900
    %v943 = vadd.f32 %v886, %v913
    %v944 = vadd.f32 %v887, %v926
    %v945 = vadd.f32 %v888, %v939
    %v946 = vmul.f32 %v942, 0.5
    %v947 = vmul.f32 %v943, 0.5
    %v948 = vmul.f32 %v944, 0.5
    %v949 = vtanh.pop %v946
    %v950 = vtanh.pop %v947
    %v951 = vtanh.pop %v948
    %v952 = vmul.f32 %v949, 0.5
    %v953 = vmul.f32 %v950, 0.5
    %v954 = vmul.f32 %v951, 0.5
    %v955 = vadd.f32 %v952, 0.5
    %v956 = vadd.f32 %v953, 0.5
    %v957 = vadd.f32 %v954, 0.5
    %v958 = vtanh.pop %v945
    %v959 = vmul.f32 %v956, %v878
    %v960 = vmul.f32 %v955, %v958
    %v961 = vadd.f32 %v959, %v960
    %v962 = vtanh.pop %v961
    %v963 = vmul.f32 %v957, %v962
    %v964 = vpack.c.bf16 %v963, %v963
    %v965 = vld [vmem:[#allocation6] sm:$0xf]
    %v966 = vld [vmem:[#allocation6 + $0x4] sm:$0xf]
    %v967 = vld [vmem:[#allocation6 + $0x8] sm:$0xf]
    %v968 = vld [vmem:[#allocation6 + $0xc] sm:$0xf]
    %v969 = vld [vmem:[#allocation6 + $0x10] sm:$0xf]
    %v970 = vld [vmem:[#allocation6 + $0x14] sm:$0xf]
    %v971 = vld [vmem:[#allocation6 + $0x18] sm:$0xf]
    %v972 = vld [vmem:[#allocation6 + $0x1c] sm:$0xf]
    %v973 = vld [vmem:[#allocation6 + $0x20] sm:$0xf]
    %v974 = vld [vmem:[#allocation6 + $0x24] sm:$0xf]
    %v975 = vld [vmem:[#allocation6 + $0x28] sm:$0xf]
    %v976 = vld [vmem:[#allocation6 + $0x2c] sm:$0xf]
    %v977 = vld [vmem:[#allocation6 + $0x30] sm:$0xf]
    %v978 = vld [vmem:[#allocation6 + $0x34] sm:$0xf]
    %v979 = vld [vmem:[#allocation6 + $0x38] sm:$0xf]
    %v980 = vld [vmem:[#allocation6 + $0x3c] sm:$0xf]
    %v981 = vld [vmem:[%s5] sm:$0x1]
    %v983 = vperm.slane %v981, 0
    %v1001 = vunpack.c.l.b16 %v965
    %v1002 = vunpack.c.l.b16 %v966
    %v1003 = vunpack.c.l.b16 %v967
    %v1004 = vunpack.c.l.b16 %v968
    %v1005 = vunpack.c.l.b16 %v969
    %v1006 = vunpack.c.l.b16 %v970
    %v1007 = vunpack.c.l.b16 %v971
    %v1008 = vunpack.c.l.b16 %v972
    %v1009 = vunpack.c.l.b16 %v973
    %v1010 = vunpack.c.l.b16 %v974
    %v1011 = vunpack.c.l.b16 %v975
    %v1012 = vunpack.c.l.b16 %v976
    %v1013 = vunpack.c.l.b16 %v977
    %v1014 = vunpack.c.l.b16 %v978
    %v1015 = vunpack.c.l.b16 %v979
    %v1016 = vunpack.c.l.b16 %v980
    %v1017 = vpack.c.b16 %v1002, %v1001
    %v1018 = vpack.c.b16 %v1004, %v1003
    %v1019 = vpack.c.b16 %v1006, %v1005
    %v1020 = vpack.c.b16 %v1008, %v1007
    %v1021 = vpack.c.b16 %v1010, %v1009
    %v1022 = vpack.c.b16 %v1012, %v1011
    %v1023 = vpack.c.b16 %v1014, %v1013
    %v1024 = vpack.c.b16 %v1016, %v1015
    %1033 = vmatpush.bf16.msra.mxu0 %v1024
    %1034 = vmatpush.bf16.msra.mxu0 %v1023
    %1035 = vmatpush.bf16.msra.mxu0 %v1022
    %1036 = vmatpush.bf16.msra.mxu0 %v1021
    %1037 = vmatpush.bf16.msra.mxu0 %v1020
    %1038 = vmatpush.bf16.msra.mxu0 %v1019
    %1039 = vmatpush.bf16.msra.mxu0 %v1018
    %1040 = vmatpush.bf16.msra.mxu0 %v1017
    %1041 = vmatmul.bf16.gmra.mxu0 %v964
    %v1042 = vpop.f32.mrf.mxu0
    %v1043 = vadd.f32 %v983, %v1042
    %v1044 = vpop.f32.mrf.mxu0
    %1045 = vdwg.mxu0
    %vm1046 = vcmp.gt.f32.partialorder %v1043, 0.0
    %v1047 = vmin.f32 %v1043, 0.0
    %v1048 = vmul.f32 %v1047, 1.442695
    %v1049 = vpow.pop %v1048
    %v1050 = vsub.f32 %v1049, 1.0
    %v1051 = vsel %vm1046, %v1043, %v1050
    %v1052 = vpack.c.bf16 %v1051, %v1051
    %v1053 = vld [vmem:[#allocation7] sm:$0xff]
    %v1054 = vld [vmem:[#allocation7 + $0x8] sm:$0xff]
    %v1055 = vld [vmem:[#allocation7 + $0x10] sm:$0xff]
    %v1056 = vld [vmem:[#allocation7 + $0x18] sm:$0xff]
    %v1057 = vld [vmem:[#allocation7 + $0x20] sm:$0xff]
    %v1058 = vld [vmem:[#allocation7 + $0x28] sm:$0xff]
    %v1059 = vld [vmem:[#allocation7 + $0x30] sm:$0xff]
    %v1060 = vld [vmem:[#allocation7 + $0x38] sm:$0xff]
    %v1061 = vld [vmem:[#allocation7 + $0x40] sm:$0xff]
    %v1062 = vld [vmem:[#allocation7 + $0x48] sm:$0xff]
    %v1063 = vld [vmem:[#allocation7 + $0x50] sm:$0xff]
    %v1064 = vld [vmem:[#allocation7 + $0x58] sm:$0xff]
    %v1065 = vld [vmem:[#allocation7 + $0x60] sm:$0xff]
    %v1066 = vld [vmem:[#allocation7 + $0x68] sm:$0xff]
    %v1067 = vld [vmem:[#allocation7 + $0x70] sm:$0xff]
    %v1068 = vld [vmem:[#allocation7 + $0x78] sm:$0xff]
    %v1069 = vld [vmem:[%s7] sm:$0x3]
    %v1071 = vperm.slane %v1069, 0
    %v1072 = vperm.slane %v1069, 1
    %v1091 = vunpack.c.l.b16 %v1053
    %v1092 = vunpack.c.h.b16 %v1053
    %v1093 = vunpack.c.l.b16 %v1054
    %v1094 = vunpack.c.h.b16 %v1054
    %v1095 = vunpack.c.l.b16 %v1055
    %v1096 = vunpack.c.h.b16 %v1055
    %v1097 = vunpack.c.l.b16 %v1056
    %v1098 = vunpack.c.h.b16 %v1056
    %v1099 = vunpack.c.l.b16 %v1057
    %v1100 = vunpack.c.h.b16 %v1057
    %v1101 = vunpack.c.l.b16 %v1058
    %v1102 = vunpack.c.h.b16 %v1058
    %v1103 = vunpack.c.l.b16 %v1059
    %v1104 = vunpack.c.h.b16 %v1059
    %v1105 = vunpack.c.l.b16 %v1060
    %v1106 = vunpack.c.h.b16 %v1060
    %v1107 = vunpack.c.l.b16 %v1061
    %v1108 = vunpack.c.h.b16 %v1061
    %v1109 = vunpack.c.l.b16 %v1062
    %v1110 = vunpack.c.h.b16 %v1062
    %v1111 = vunpack.c.l.b16 %v1063
    %v1112 = vunpack.c.h.b16 %v1063
    %v1113 = vunpack.c.l.b16 %v1064
    %v1114 = vunpack.c.h.b16 %v1064
    %v1115 = vunpack.c.l.b16 %v1065
    %v1116 = vunpack.c.h.b16 %v1065
    %v1117 = vunpack.c.l.b16 %v1066
    %v1118 = vunpack.c.h.b16 %v1066
    %v1119 = vunpack.c.l.b16 %v1067
    %v1120 = vunpack.c.h.b16 %v1067
    %v1121 = vunpack.c.l.b16 %v1068
    %v1122 = vunpack.c.h.b16 %v1068
    %v1123 = vpack.c.b16 %v1093, %v1091
    %v1124 = vpack.c.b16 %v1094, %v1092
    %v1125 = vpack.c.b16 %v1097, %v1095
    %v1126 = vpack.c.b16 %v1098, %v1096
    %v1127 = vpack.c.b16 %v1101, %v1099
    %v1128 = vpack.c.b16 %v1102, %v1100
    %v1129 = vpack.c.b16 %v1105, %v1103
    %v1130 = vpack.c.b16 %v1106, %v1104
    %v1131 = vpack.c.b16 %v1109, %v1107
    %v1132 = vpack.c.b16 %v1110, %v1108
    %v1133 = vpack.c.b16 %v1113, %v1111
    %v1134 = vpack.c.b16 %v1114, %v1112
    %v1135 = vpack.c.b16 %v1117, %v1115
    %v1136 = vpack.c.b16 %v1118, %v1116
    %v1137 = vpack.c.b16 %v1121, %v1119
    %v1138 = vpack.c.b16 %v1122, %v1120
    %1155 = vmatpush.bf16.msra.mxu0 %v1137
    %1156 = vmatpush.bf16.msra.mxu0 %v1135
    %1157 = vmatpush.bf16.msra.mxu0 %v1133
    %1158 = vmatpush.bf16.msra.mxu0 %v1131
    %1159 = vmatpush.bf16.msra.mxu0 %v1129
    %1160 = vmatpush.bf16.msra.mxu0 %v1127
    %1161 = vmatpush.bf16.msra.mxu0 %v1125
    %1162 = vmatpush.bf16.msra.mxu0 %v1123
    %1163 = vmatmul.bf16.gmra.mxu0 %v1052
    %v1164 = vpop.f32.mrf.mxu0
    %v1165 = vadd.f32 %v1071, %v1164
    %v1166 = vpop.f32.mrf.mxu0
    %1167 = vdwg.mxu0
    %1168 = vmatpush.bf16.msra.mxu0 %v1138
    %1169 = vmatpush.bf16.msra.mxu0 %v1136
    %1170 = vmatpush.bf16.msra.mxu0 %v1134
    %1171 = vmatpush.bf16.msra.mxu0 %v1132
    %1172 = vmatpush.bf16.msra.mxu0 %v1130
    %1173 = vmatpush.bf16.msra.mxu0 %v1128
    %1174 = vmatpush.bf16.msra.mxu0 %v1126
    %1175 = vmatpush.bf16.msra.mxu0 %v1124
    %1176 = vmatmul.bf16.gmra.mxu0 %v1052
    %v1177 = vpop.f32.mrf.mxu0
    %v1178 = vadd.f32 %v1072, %v1177
    %v1179 = vpop.f32.mrf.mxu0
    %1180 = vdwg.mxu0
    %vm1181 = vcmp.gt.f32.partialorder %v1165, 0.0
    %vm1182 = vcmp.gt.f32.partialorder %v1178, 0.0
    %v1183 = vmin.f32 %v1165, 0.0
    %v1184 = vmin.f32 %v1178, 0.0
    %v1185 = vmul.f32 %v1183, 1.442695
    %v1186 = vpow.pop %v1185
    %v1187 = vmul.f32 %v1184, 1.442695
    %v1188 = vpow.pop %v1187
    %v1189 = vsub.f32 %v1186, 1.0
    %v1190 = vsub.f32 %v1188, 1.0
    %v1191 = vsel %vm1181, %v1165, %v1189
    %v1192 = vsel %vm1182, %v1178, %v1190
    %v1193 = vld [vmem:[%s8] sm:$0x3]
    %v1195 = vperm.slane %v1193, 0
    %v1196 = vperm.slane %v1193, 1
    %v1199 = vmul.f32 %v1191, %v1195
    %v1200 = vmul.f32 %v1192, %v1196
    %v1201 = vadd.f32 %v1199, %v1200
    %1202 = vadd.xlane.f32.xlu0 %v1201
    %v1203 = vpop.xlane.xlu0 %1202
    %v1204 = vld [vmem:[%s1] sm:$0xff]
    %v1205 = vld [vmem:[%s9] sm:$0x1]
    %v1207 = vperm.slane %v1205, 0
    %v1209 = vmul.f32 %v1204, %v1207
    %v1210 = vadd.f32 %v1203, %v1209
    %1211 = vrot.lane.b32.xlu0 %v1207, 127
    %v1212 = vpop.permute.xlu0 %1211
    %v1214 = vadd.f32 %v1210, %v1212
    %vm1215 = vcmask 7168
    %1216 = vst.msk [vmem:[%s10] sm:$0xff] %vm1215, %v1214
    // Predicated region
    $region58: #{tpu_custom_call.1} parent=1 // pred_check
      _
    $region59: #{tpu_custom_call.1} parent=1 // pred_check_branch
      %1218 = sbr.rel (0) target = $region61
    $region60: #{tpu_custom_call.1} parent=1 // pred_region
      _
    $region61: #{tpu_custom_call.1} parent=1 // pred_fallthru
      _
    // Predicated region
    $region62: #{tpu_custom_call.1} parent=1 // pred_check
      _
    $region63: #{tpu_custom_call.1} parent=1 // pred_check_branch
      %1220 = sbr.rel (0) target = $region65
    $region64: #{tpu_custom_call.1} parent=1 // pred_region
      _
    $region65: #{tpu_custom_call.1} parent=1 // pred_fallthru
      _
    %1221 = vsyncpa [#allocation3], 1
    %1222 = vsyncpa [#allocation5], 1
    %1223 = vsyncpa [#allocation8], 1

</llo_original>
